<compile_context>
chip_gen: v7x
topology: tpu7x:2x2x1
jax: 0.10.0
libtpu: 0.0.40
codegen_flags: <defaults>
</compile_context>

<pallas_src>
import math

import jax
import jax.numpy as jnp
from jax import lax
from jax.experimental import pallas as pl
from jax.experimental.pallas import tpu as pltpu

NUM_HEADS = 4     # SSA(d_model=hidden_size, h=4)


def _q_chunk(n):
    # Single q slab when the (N, qs) logits slab stays small (~31 vregs at N=176):
    # one softmax reduce per head and a single lane-dense feat store.
    # TODO(synk): for much larger feature maps add key-axis tiling + online softmax;
    # q-chunking alone does not cap the (N, qs) slab.
    return n if n <= 256 else 128


def _refine_kernel(x_ref, wo_ref, bo_ref, cw_ref, cb_ref, feat_ref, mask_ref):
    """Processes one batch element, channel-major.

    x_ref    : (1, C, N)  tokens, channel-major (q = k = v for SSA), f32
    wo_ref   : (C, C)     fc_o weight (out, in), bf16
    bo_ref   : (C, 1)     fc_o bias, f32
    cw_ref   : (1, C)     1x1 conv weight (out_channels = 1), f32
    cb_ref   : (1, 1)     1x1 conv bias, f32
    feat_ref : (1, C, N)  output: spat + residual
    mask_ref : (1, 1, N)  output: sigmoid(conv1x1(feat))
    """
    _, C, N = x_ref.shape
    d_k = C // NUM_HEADS
    scale = 1.0 / math.sqrt(d_k)
    q_chunk = _q_chunk(N)

    x_cn = x_ref[0]            # (C, N) f32, resident
    bo = bo_ref[...]           # (C, 1) f32
    wo_bf = wo_ref[...]        # (C, C) bf16

    for q0 in range(0, N, q_chunk):                        # static (1 iter at N<=256)
        qs = min(q_chunk, N - q0)
        o_heads = []
        for h in range(NUM_HEADS):                         # static unroll (4 heads)
            x_h = x_cn[h * d_k:(h + 1) * d_k, :]           # (d_k, N) f32, 8-row aligned slice
            k_bf = x_h.astype(jnp.bfloat16)                # keys / values, bf16 MXU operand
            q_bf = (x_h[:, q0:q0 + qs] * scale).astype(jnp.bfloat16)   # (d_k, qs)
            # scores[k, q] = sum_d k[d, k] * q[d, q]  -> keys along sublanes, queries along lanes
            scores = lax.dot_general(
                k_bf, q_bf, (((0,), (0,)), ((), ())),
                preferred_element_type=jnp.float32)        # (N, qs) f32
            m = jnp.max(scores, axis=0, keepdims=True)     # (1, qs)  softmax over keys
            e = jnp.exp(scores - m)                        # (N, qs) f32 (EUP)
            recip = 1.0 / jnp.sum(e, axis=0, keepdims=True)  # (1, qs), exact divide
            # Unnormalized PV: canonical (d_k, N) @ (N, qs) matmul, K = N.
            o_h = jnp.dot(k_bf, e.astype(jnp.bfloat16),
                          preferred_element_type=jnp.float32)          # (d_k, qs) f32
            # Normalize the small per-head result instead of the (N, qs) slab.
            o_heads.append(o_h * recip)
        # Concat heads along channels (8-row aligned pieces), then one fc_o matmul (K = C).
        o_cat = jnp.concatenate(o_heads, axis=0)           # (C, qs) f32
        spat = jnp.dot(wo_bf, o_cat.astype(jnp.bfloat16),
                       preferred_element_type=jnp.float32)             # (C, qs) f32
        feat = spat + bo + x_cn[:, q0:q0 + qs]             # bias + residual, channel-major
        feat_ref[0, :, q0:q0 + qs] = feat.astype(feat_ref.dtype)

    # 1x1 conv (C -> 1) + sigmoid over the full token axis, once per batch element.
    feat_full = feat_ref[0]                                # (C, N) read back from VMEM
    logits = jnp.dot(cw_ref[...], feat_full,
                     preferred_element_type=jnp.float32) + cb_ref[0, 0]   # (1, N)
    mask_ref[0] = jax.nn.sigmoid(logits).astype(mask_ref.dtype)


def refine_mechanism(x_nchw, wo, bo, conv_w, conv_b):
    """x_nchw: (B, C, H, W) float32.
    wo: (C, C) torch Linear fc_o weight (out, in).  bo: (C,).
    conv_w: (1, C, 1, 1) torch Conv2d weight.  conv_b: (1,).
    Returns (refine_feat (B, C, H, W), mask (B, 1, H, W))."""
    B, C, H, W = x_nchw.shape
    N = H * W
    assert C % NUM_HEADS == 0

    # NCHW is already channel-major over tokens: pure reshape, no transpose.
    x_cn = x_nchw.reshape(B, C, N).astype(jnp.float32)

    wo_bf = wo.astype(jnp.bfloat16)                       # (C, C), single buffer (no per-head split)
    bo_col = bo.reshape(C, 1).astype(jnp.float32)
    cw_row = conv_w.reshape(1, C).astype(jnp.float32)
    cb_2d = conv_b.reshape(1, 1).astype(jnp.float32)

    # Always one batch element per grid step: trivially within VMEM on every
    # generation (incl. v7x's 64 MiB / 32 MiB scoped default) and lets megacore
    # chips shard the batch across TensorCores.
    feat_cn, mask_cn = pl.pallas_call(
        _refine_kernel,
        out_shape=(
            jax.ShapeDtypeStruct((B, C, N), jnp.float32),
            jax.ShapeDtypeStruct((B, 1, N), jnp.float32),
        ),
        grid_spec=pltpu.PrefetchScalarGridSpec(
            num_scalar_prefetch=0,
            grid=(B,),
            in_specs=[
                pl.BlockSpec((1, C, N), lambda b: (b, 0, 0)),   # x, channel-major
                pl.BlockSpec((C, C), lambda b: (0, 0)),         # fc_o weight (bf16)
                pl.BlockSpec((C, 1), lambda b: (0, 0)),         # fc_o bias
                pl.BlockSpec((1, C), lambda b: (0, 0)),         # conv weight
                pl.BlockSpec((1, 1), lambda b: (0, 0)),         # conv bias
            ],
            out_specs=[
                pl.BlockSpec((1, C, N), lambda b: (b, 0, 0)),   # feat, lane-dense
                pl.BlockSpec((1, 1, N), lambda b: (b, 0, 0)),   # mask, lane-dense
            ],
        ),
        compiler_params=pltpu.CompilerParams(
            dimension_semantics=("parallel",),
        ),
    )(x_cn, wo_bf, bo_col, cw_row, cb_2d)

    # Channel-major -> NCHW is again a pure reshape (no transpose kernels).
    refine_feat = feat_cn.reshape(B, C, H, W)
    mask = mask_cn.reshape(B, 1, H, W)
    return refine_feat, mask


def _reference(x_nchw, wo, bo, conv_w, conv_b):
    """Pure-JAX reference mirroring the PyTorch forward (eval mode)."""
    B, C, H, W = x_nchw.shape
    N = H * W
    d_k = C // NUM_HEADS
    x = jnp.transpose(x_nchw.reshape(B, C, N), (0, 2, 1))                 # (B, N, C)
    q = x.reshape(B, N, NUM_HEADS, d_k).transpose(0, 2, 1, 3)             # (B, h, N, d_k)
    att = jnp.einsum("bhnd,bhmd->bhnm", q, q) / math.sqrt(d_k)
    att = jax.nn.softmax(att, axis=-1)
    out = jnp.einsum("bhnm,bhmd->bhnd", att, q).transpose(0, 2, 1, 3).reshape(B, N, C)
    spat = out @ wo.T + bo
    feat = spat + x
    refine_feat = jnp.transpose(feat, (0, 2, 1)).reshape(B, C, H, W)
    logits = feat @ conv_w.reshape(1, C).T + conv_b
    mask = jnp.transpose(logits, (0, 2, 1)).reshape(B, 1, H, W)
    return refine_feat, jax.nn.sigmoid(mask)


if __name__ == "__main__":
    # Shapes consistent with the module: hidden_size=32 (4 heads x 8),
    # spatial H=22 (hardcoded in the PyTorch rearrange), W=8, batch=2.
    B, C, H, W = 2, 32, 22, 8

    key = jax.random.PRNGKey(0)
    kx, kwo, kbo, kcw, kcb = jax.random.split(key, 5)
    x = jax.random.normal(kx, (B, C, H, W), dtype=jnp.float32)

    # Deterministic synthetic parameters (shapes from the module __init__).
    wo = jax.random.normal(kwo, (C, C), dtype=jnp.float32) * (1.0 / math.sqrt(C))   # fc_o weight (out, in)
    bo = jax.random.normal(kbo, (C,), dtype=jnp.float32) * 0.01                     # fc_o bias
    conv_w = jax.random.normal(kcw, (1, C, 1, 1), dtype=jnp.float32) * (1.0 / math.sqrt(C))
    conv_b = jax.random.normal(kcb, (1,), dtype=jnp.float32) * 0.01

    feat, mask = jax.block_until_ready(refine_mechanism(x, wo, bo, conv_w, conv_b))

    ref_feat, ref_mask = _reference(x, wo, bo, conv_w, conv_b)
    assert feat.shape == (B, C, H, W) and mask.shape == (B, 1, H, W)
    # Softmax denominator is now an exact divide; the remaining deviation vs. the
    # f32 reference comes from bf16 MXU operands (scores / PV / fc_o) with f32 accumulation.
    assert jnp.allclose(feat, ref_feat, atol=2e-2, rtol=2e-2)
    assert jnp.allclose(mask, ref_mask, atol=1e-2, rtol=1e-2)

    print("KERNEL_OK")
</pallas_src>

<mosaic_0001>
module attributes {stable_mosaic.version = 11 : i64} {
  func.func @_refine_kernel(%arg0: i32, %arg1: memref<1x32x176xf32, #tpu.memory_space<vmem>>, %arg2: memref<32x32xbf16, #tpu.memory_space<vmem>>, %arg3: memref<32x1xf32, #tpu.memory_space<vmem>>, %arg4: memref<1x32xf32, #tpu.memory_space<vmem>>, %arg5: memref<1x1xf32, #tpu.memory_space<vmem>>, %arg6: memref<1x32x176xf32, #tpu.memory_space<vmem>>, %arg7: memref<1x1x176xf32, #tpu.memory_space<vmem>>) attributes {dimension_semantics = [#tpu.dimension_semantics<parallel>], iteration_bounds = array<i64: 2>, scalar_prefetch = 0 : i64, scratch_operands = 0 : i64, tpu.core_type = #tpu.core_type<tc>, window_params = [{transform_indices = @transform_0, window_bounds = array<i64: 1, 32, 176>}, {pipeline_mode = #tpu.pipeline_mode<synchronous>, transform_indices = @transform_1, window_bounds = array<i64: 32, 32>}, {pipeline_mode = #tpu.pipeline_mode<synchronous>, transform_indices = @transform_2, window_bounds = array<i64: 32, 1>}, {pipeline_mode = #tpu.pipeline_mode<synchronous>, transform_indices = @transform_3, window_bounds = array<i64: 1, 32>}, {pipeline_mode = #tpu.pipeline_mode<synchronous>, transform_indices = @transform_4, window_bounds = array<i64: 1, 1>}, {transform_indices = @transform_5, window_bounds = array<i64: 1, 32, 176>}, {transform_indices = @transform_6, window_bounds = array<i64: 1, 1, 176>}]} {
    %c0 = arith.constant 0 : index
    %c0_0 = arith.constant 0 : index
    %c0_1 = arith.constant 0 : index
    %0 = vector.load %arg1[%c0, %c0_0, %c0_1] : memref<1x32x176xf32, #tpu.memory_space<vmem>>, vector<1x32x176xf32>
    %1 = vector.shape_cast %0 : vector<1x32x176xf32> to vector<32x176xf32>
    %c0_2 = arith.constant 0 : index
    %c0_3 = arith.constant 0 : index
    %2 = vector.load %arg3[%c0_2, %c0_3] : memref<32x1xf32, #tpu.memory_space<vmem>>, vector<32x1xf32>
    %c0_4 = arith.constant 0 : index
    %c0_5 = arith.constant 0 : index
    %3 = vector.load %arg2[%c0_4, %c0_5] : memref<32x32xbf16, #tpu.memory_space<vmem>>, vector<32x32xbf16>
    %4 = vector.extract_strided_slice %1 {offsets = [0, 0], sizes = [8, 176], strides = [1, 1]} : vector<32x176xf32> to vector<8x176xf32>
    %5 = arith.truncf %4 : vector<8x176xf32> to vector<8x176xbf16>
    %cst = arith.constant 0.353553385 : f32
    %6 = vector.broadcast %cst : f32 to vector<8x176xf32>
    %7 = arith.mulf %4, %6 : vector<8x176xf32>
    %8 = arith.truncf %7 : vector<8x176xf32> to vector<8x176xbf16>
    %cst_6 = arith.constant dense<0.000000e+00> : vector<176x176xf32>
    %9 = tpu.matmul %5, %8, %cst_6 {dimension_numbers = #tpu.dot_dimension_numbers<[0], [0], [1], [1], [0, 1, 1, 1], [], []>} : vector<8x176xbf16>, vector<8x176xbf16>, vector<176x176xf32> -> vector<176x176xf32>
    %cst_7 = arith.constant dense<0xFF800000> : vector<176xf32>
    %10 = vector.multi_reduction <maximumf>, %9, %cst_7 [0] : vector<176x176xf32> to vector<176xf32>
    %11 = vector.shape_cast %10 : vector<176xf32> to vector<1x176xf32>
    %12 = vector.broadcast %11 : vector<1x176xf32> to vector<176x176xf32>
    %13 = arith.subf %9, %12 : vector<176x176xf32>
    %14 = math.exp %13 : vector<176x176xf32>
    %cst_8 = arith.constant dense<0.000000e+00> : vector<176xf32>
    %15 = vector.multi_reduction <add>, %14, %cst_8 [0] : vector<176x176xf32> to vector<176xf32>
    %16 = vector.shape_cast %15 : vector<176xf32> to vector<1x176xf32>
    %cst_9 = arith.constant 1.000000e+00 : f32
    %17 = vector.broadcast %cst_9 : f32 to vector<1x176xf32>
    %18 = arith.divf %17, %16 : vector<1x176xf32>
    %19 = arith.truncf %14 : vector<176x176xf32> to vector<176x176xbf16>
    %cst_10 = arith.constant dense<0.000000e+00> : vector<8x176xf32>
    %20 = tpu.matmul %5, %19, %cst_10 {dimension_numbers = #tpu.dot_dimension_numbers<[1], [0], [0], [1], [0, 0, 1, 1], [], []>} : vector<8x176xbf16>, vector<176x176xbf16>, vector<8x176xf32> -> vector<8x176xf32>
    %21 = vector.broadcast %18 : vector<1x176xf32> to vector<8x176xf32>
    %22 = arith.mulf %20, %21 : vector<8x176xf32>
    %23 = vector.extract_strided_slice %1 {offsets = [8, 0], sizes = [8, 176], strides = [1, 1]} : vector<32x176xf32> to vector<8x176xf32>
    %24 = arith.truncf %23 : vector<8x176xf32> to vector<8x176xbf16>
    %cst_11 = arith.constant 0.353553385 : f32
    %25 = vector.broadcast %cst_11 : f32 to vector<8x176xf32>
    %26 = arith.mulf %23, %25 : vector<8x176xf32>
    %27 = arith.truncf %26 : vector<8x176xf32> to vector<8x176xbf16>
    %cst_12 = arith.constant dense<0.000000e+00> : vector<176x176xf32>
    %28 = tpu.matmul %24, %27, %cst_12 {dimension_numbers = #tpu.dot_dimension_numbers<[0], [0], [1], [1], [0, 1, 1, 1], [], []>} : vector<8x176xbf16>, vector<8x176xbf16>, vector<176x176xf32> -> vector<176x176xf32>
    %cst_13 = arith.constant dense<0xFF800000> : vector<176xf32>
    %29 = vector.multi_reduction <maximumf>, %28, %cst_13 [0] : vector<176x176xf32> to vector<176xf32>
    %30 = vector.shape_cast %29 : vector<176xf32> to vector<1x176xf32>
    %31 = vector.broadcast %30 : vector<1x176xf32> to vector<176x176xf32>
    %32 = arith.subf %28, %31 : vector<176x176xf32>
    %33 = math.exp %32 : vector<176x176xf32>
    %cst_14 = arith.constant dense<0.000000e+00> : vector<176xf32>
    %34 = vector.multi_reduction <add>, %33, %cst_14 [0] : vector<176x176xf32> to vector<176xf32>
    %35 = vector.shape_cast %34 : vector<176xf32> to vector<1x176xf32>
    %cst_15 = arith.constant 1.000000e+00 : f32
    %36 = vector.broadcast %cst_15 : f32 to vector<1x176xf32>
    %37 = arith.divf %36, %35 : vector<1x176xf32>
    %38 = arith.truncf %33 : vector<176x176xf32> to vector<176x176xbf16>
    %cst_16 = arith.constant dense<0.000000e+00> : vector<8x176xf32>
    %39 = tpu.matmul %24, %38, %cst_16 {dimension_numbers = #tpu.dot_dimension_numbers<[1], [0], [0], [1], [0, 0, 1, 1], [], []>} : vector<8x176xbf16>, vector<176x176xbf16>, vector<8x176xf32> -> vector<8x176xf32>
    %40 = vector.broadcast %37 : vector<1x176xf32> to vector<8x176xf32>
    %41 = arith.mulf %39, %40 : vector<8x176xf32>
    %42 = vector.extract_strided_slice %1 {offsets = [16, 0], sizes = [8, 176], strides = [1, 1]} : vector<32x176xf32> to vector<8x176xf32>
    %43 = arith.truncf %42 : vector<8x176xf32> to vector<8x176xbf16>
    %cst_17 = arith.constant 0.353553385 : f32
    %44 = vector.broadcast %cst_17 : f32 to vector<8x176xf32>
    %45 = arith.mulf %42, %44 : vector<8x176xf32>
    %46 = arith.truncf %45 : vector<8x176xf32> to vector<8x176xbf16>
    %cst_18 = arith.constant dense<0.000000e+00> : vector<176x176xf32>
    %47 = tpu.matmul %43, %46, %cst_18 {dimension_numbers = #tpu.dot_dimension_numbers<[0], [0], [1], [1], [0, 1, 1, 1], [], []>} : vector<8x176xbf16>, vector<8x176xbf16>, vector<176x176xf32> -> vector<176x176xf32>
    %cst_19 = arith.constant dense<0xFF800000> : vector<176xf32>
    %48 = vector.multi_reduction <maximumf>, %47, %cst_19 [0] : vector<176x176xf32> to vector<176xf32>
    %49 = vector.shape_cast %48 : vector<176xf32> to vector<1x176xf32>
    %50 = vector.broadcast %49 : vector<1x176xf32> to vector<176x176xf32>
    %51 = arith.subf %47, %50 : vector<176x176xf32>
    %52 = math.exp %51 : vector<176x176xf32>
    %cst_20 = arith.constant dense<0.000000e+00> : vector<176xf32>
    %53 = vector.multi_reduction <add>, %52, %cst_20 [0] : vector<176x176xf32> to vector<176xf32>
    %54 = vector.shape_cast %53 : vector<176xf32> to vector<1x176xf32>
    %cst_21 = arith.constant 1.000000e+00 : f32
    %55 = vector.broadcast %cst_21 : f32 to vector<1x176xf32>
    %56 = arith.divf %55, %54 : vector<1x176xf32>
    %57 = arith.truncf %52 : vector<176x176xf32> to vector<176x176xbf16>
    %cst_22 = arith.constant dense<0.000000e+00> : vector<8x176xf32>
    %58 = tpu.matmul %43, %57, %cst_22 {dimension_numbers = #tpu.dot_dimension_numbers<[1], [0], [0], [1], [0, 0, 1, 1], [], []>} : vector<8x176xbf16>, vector<176x176xbf16>, vector<8x176xf32> -> vector<8x176xf32>
    %59 = vector.broadcast %56 : vector<1x176xf32> to vector<8x176xf32>
    %60 = arith.mulf %58, %59 : vector<8x176xf32>
    %61 = vector.extract_strided_slice %1 {offsets = [24, 0], sizes = [8, 176], strides = [1, 1]} : vector<32x176xf32> to vector<8x176xf32>
    %62 = arith.truncf %61 : vector<8x176xf32> to vector<8x176xbf16>
    %cst_23 = arith.constant 0.353553385 : f32
    %63 = vector.broadcast %cst_23 : f32 to vector<8x176xf32>
    %64 = arith.mulf %61, %63 : vector<8x176xf32>
    %65 = arith.truncf %64 : vector<8x176xf32> to vector<8x176xbf16>
    %cst_24 = arith.constant dense<0.000000e+00> : vector<176x176xf32>
    %66 = tpu.matmul %62, %65, %cst_24 {dimension_numbers = #tpu.dot_dimension_numbers<[0], [0], [1], [1], [0, 1, 1, 1], [], []>} : vector<8x176xbf16>, vector<8x176xbf16>, vector<176x176xf32> -> vector<176x176xf32>
    %cst_25 = arith.constant dense<0xFF800000> : vector<176xf32>
    %67 = vector.multi_reduction <maximumf>, %66, %cst_25 [0] : vector<176x176xf32> to vector<176xf32>
    %68 = vector.shape_cast %67 : vector<176xf32> to vector<1x176xf32>
    %69 = vector.broadcast %68 : vector<1x176xf32> to vector<176x176xf32>
    %70 = arith.subf %66, %69 : vector<176x176xf32>
    %71 = math.exp %70 : vector<176x176xf32>
    %cst_26 = arith.constant dense<0.000000e+00> : vector<176xf32>
    %72 = vector.multi_reduction <add>, %71, %cst_26 [0] : vector<176x176xf32> to vector<176xf32>
    %73 = vector.shape_cast %72 : vector<176xf32> to vector<1x176xf32>
    %cst_27 = arith.constant 1.000000e+00 : f32
    %74 = vector.broadcast %cst_27 : f32 to vector<1x176xf32>
    %75 = arith.divf %74, %73 : vector<1x176xf32>
    %76 = arith.truncf %71 : vector<176x176xf32> to vector<176x176xbf16>
    %cst_28 = arith.constant dense<0.000000e+00> : vector<8x176xf32>
    %77 = tpu.matmul %62, %76, %cst_28 {dimension_numbers = #tpu.dot_dimension_numbers<[1], [0], [0], [1], [0, 0, 1, 1], [], []>} : vector<8x176xbf16>, vector<176x176xbf16>, vector<8x176xf32> -> vector<8x176xf32>
    %78 = vector.broadcast %75 : vector<1x176xf32> to vector<8x176xf32>
    %79 = arith.mulf %77, %78 : vector<8x176xf32>
    %80 = tpu.concatenate %22, %41, %60, %79 in 0 : vector<8x176xf32>, vector<8x176xf32>, vector<8x176xf32>, vector<8x176xf32> -> vector<32x176xf32>
    %81 = arith.truncf %80 : vector<32x176xf32> to vector<32x176xbf16>
    %cst_29 = arith.constant dense<0.000000e+00> : vector<32x176xf32>
    %82 = tpu.matmul %3, %81, %cst_29 {dimension_numbers = #tpu.dot_dimension_numbers<[1], [0], [0], [1], [0, 0, 1, 1], [], []>} : vector<32x32xbf16>, vector<32x176xbf16>, vector<32x176xf32> -> vector<32x176xf32>
    %83 = vector.broadcast %2 : vector<32x1xf32> to vector<32x176xf32>
    %84 = arith.addf %82, %83 : vector<32x176xf32>
    %85 = arith.addf %84, %1 : vector<32x176xf32>
    %c0_30 = arith.constant 0 : index
    %c0_31 = arith.constant 0 : index
    %c0_32 = arith.constant 0 : index
    %86 = vector.load %arg6[%c0_30, %c0_31, %c0_32] : memref<1x32x176xf32, #tpu.memory_space<vmem>>, vector<1x32x176xf32>
    %87 = vector.shape_cast %86 : vector<1x32x176xf32> to vector<32x176xf32>
    %88 = vector.shape_cast %85 : vector<32x176xf32> to vector<1x32x176xf32>
    tpu.vector_store %arg6[%c0_30, %c0_31, %c0_32], %88 {strides = array<i32>} : memref<1x32x176xf32, #tpu.memory_space<vmem>>, vector<1x32x176xf32>,
    %c0_33 = arith.constant 0 : index
    %c0_34 = arith.constant 0 : index
    %c0_35 = arith.constant 0 : index
    %89 = vector.load %arg6[%c0_33, %c0_34, %c0_35] : memref<1x32x176xf32, #tpu.memory_space<vmem>>, vector<1x32x176xf32>
    %90 = vector.shape_cast %89 : vector<1x32x176xf32> to vector<32x176xf32>
    %c0_36 = arith.constant 0 : index
    %c0_37 = arith.constant 0 : index
    %91 = vector.load %arg4[%c0_36, %c0_37] : memref<1x32xf32, #tpu.memory_space<vmem>>, vector<1x32xf32>
    %cst_38 = arith.constant dense<0.000000e+00> : vector<1x176xf32>
    %92 = tpu.matmul %91, %90, %cst_38 {dimension_numbers = #tpu.dot_dimension_numbers<[1], [0], [0], [1], [0, 0, 1, 1], [], []>} : vector<1x32xf32>, vector<32x176xf32>, vector<1x176xf32> -> vector<1x176xf32>
    %c0_39 = arith.constant 0 : index
    %c0_40 = arith.constant 0 : index
    %93 = vector.load %arg5[%c0_39, %c0_40] : memref<1x1xf32, #tpu.memory_space<vmem>>, vector<1x1xf32>
    %94 = vector.extract %93[0, 0] : f32 from vector<1x1xf32>
    %95 = vector.broadcast %94 : f32 to vector<1x176xf32>
    %96 = arith.addf %92, %95 : vector<1x176xf32>
    %97 = arith.negf %96 : vector<1x176xf32>
    %98 = math.exp %97 : vector<1x176xf32>
    %cst_41 = arith.constant 1.000000e+00 : f32
    %99 = vector.broadcast %cst_41 : f32 to vector<1x176xf32>
    %100 = arith.addf %99, %98 : vector<1x176xf32>
    %101 = arith.divf %99, %100 : vector<1x176xf32>
    %c0_42 = arith.constant 0 : index
    %c0_43 = arith.constant 0 : index
    %c0_44 = arith.constant 0 : index
    %102 = vector.load %arg7[%c0_42, %c0_43, %c0_44] : memref<1x1x176xf32, #tpu.memory_space<vmem>>, vector<1x1x176xf32>
    %103 = vector.shape_cast %102 : vector<1x1x176xf32> to vector<1x176xf32>
    %104 = vector.shape_cast %101 : vector<1x176xf32> to vector<1x1x176xf32>
    tpu.vector_store %arg7[%c0_42, %c0_43, %c0_44], %104 {strides = array<i32>} : memref<1x1x176xf32, #tpu.memory_space<vmem>>, vector<1x1x176xf32>,
    return
  }
  func.func @transform_0(%arg0: i32) -> (i32, i32, i32) {
    %c0_i32 = arith.constant 0 : i32
    %c0_i32_0 = arith.constant 0 : i32
    %c0_i32_1 = arith.constant 0 : i32
    return %arg0, %c0_i32, %c0_i32_0 : i32, i32, i32
  }
  func.func @transform_1(%arg0: i32) -> (i32, i32) {
    %c0_i32 = arith.constant 0 : i32
    %c0_i32_0 = arith.constant 0 : i32
    %c0_i32_1 = arith.constant 0 : i32
    return %c0_i32, %c0_i32_0 : i32, i32
  }
  func.func @transform_2(%arg0: i32) -> (i32, i32) {
    %c0_i32 = arith.constant 0 : i32
    %c0_i32_0 = arith.constant 0 : i32
    %c0_i32_1 = arith.constant 0 : i32
    return %c0_i32, %c0_i32_0 : i32, i32
  }
  func.func @transform_3(%arg0: i32) -> (i32, i32) {
    %c0_i32 = arith.constant 0 : i32
    %c0_i32_0 = arith.constant 0 : i32
    %c0_i32_1 = arith.constant 0 : i32
    return %c0_i32, %c0_i32_0 : i32, i32
  }
  func.func @transform_4(%arg0: i32) -> (i32, i32) {
    %c0_i32 = arith.constant 0 : i32
    %c0_i32_0 = arith.constant 0 : i32
    %c0_i32_1 = arith.constant 0 : i32
    return %c0_i32, %c0_i32_0 : i32, i32
  }
  func.func @transform_5(%arg0: i32) -> (i32, i32, i32) {
    %c0_i32 = arith.constant 0 : i32
    %c0_i32_0 = arith.constant 0 : i32
    %c0_i32_1 = arith.constant 0 : i32
    return %arg0, %c0_i32, %c0_i32_0 : i32, i32, i32
  }
  func.func @transform_6(%arg0: i32) -> (i32, i32, i32) {
    %c0_i32 = arith.constant 0 : i32
    %c0_i32_0 = arith.constant 0 : i32
    %c0_i32_1 = arith.constant 0 : i32
    return %arg0, %c0_i32, %c0_i32_0 : i32, i32, i32
  }
}

</mosaic_0001>

<llo_original>
// kernel: tpu_custom_call.1
$region0: #{tpu_custom_call.1}
  #allocation0 [shape = 'u32[]', space=smem, size = 0x4, offset = 0x4, fixed_abs, tag = 'smem constant byte address 0x4 - core index']
  #allocation1 [shape = 'u32[144,128]{1,0:T(1,128)}', space=vmem, size = 0x12000, scoped, tag = 'internal scratch']
  #allocation2 [shape = 'f32[1,1]{1,0:T(1,128)S(1)}', space=vmem, size = 0x200, scoped, tag = 'scoped memory for tpu_custom_call.1']
  %s0 = inlined_call_operand.hbm [shape: f32[2,32,176], index: 0, kind: input, shape index: {}]
  %s1 = inlined_call_operand.vmem [shape: bf16[32,32], index: 1, kind: input, shape index: {}]
  %s2 = inlined_call_operand.vmem [shape: f32[32,1], index: 2, kind: input, shape index: {}]
  %s3 = inlined_call_operand.vmem [shape: f32[1,32], index: 3, kind: input, shape index: {}]
  %s4 = inlined_call_operand.<no memory space> [shape: f32[1,1], index: 4, kind: input, shape index: {}]
  %s5 = inlined_call_operand.hbm [shape: f32[2,32,176], index: 5, kind: output, shape index: {0}]
  %s6 = inlined_call_operand.hbm [shape: f32[2,1,176], index: 6, kind: output, shape index: {1}]
  %7 = xla_tuple %s5, %s6
  %s8 = sld [smem:[#allocation0]]
  $region65: #{tpu_custom_call.1} parent=0
    _
  %s10 = ssub.s32 1, %s8
  %s11 = scalar_select 0, %s10, %s8
  %v12 = vstv %s4
  %13 = vst [vmem:[#allocation2] sm:$0x1] %v12
  $region1: #{tpu_custom_call.1} parent=0
    #allocation3 [shape = 'u8[65536]{0}', space=vmem, size = 0x10000, scoped, tag = 'input window, operand 0']
    #allocation4 [shape = 's32[2]{0}', space=sflag, size = 0x8, scoped, tag = 'scoped memory for tpu_custom_call.1']
    #allocation5 [shape = 's32[2]{0}', space=sflag, size = 0x8, scoped, tag = 'scoped memory for tpu_custom_call.1']
    #allocation6 [shape = 'u8[65536]{0}', space=vmem, size = 0x10000, scoped, tag = 'output window, operand 0']
    #allocation7 [shape = 'u8[2048]{0}', space=vmem, size = 0x800, scoped, tag = 'output window, operand 1']
    #allocation8 [shape = 's32[2]{0}', space=sflag, size = 0x8, scoped, tag = 'scoped memory for tpu_custom_call.1']
    %14 = vsyncpa [#allocation4], 0
    %s15 = scalar_lea.sflag [#allocation4], 1
    %16 = vsyncpa %s15, 0
    %17 = vsyncpa [#allocation5], 0
    %s18 = scalar_lea.sflag [#allocation5], 1
    %19 = vsyncpa %s18, 0
    %20 = vsyncpa [#allocation8], 0
    %s21 = scalar_lea.sflag [#allocation8], 1
    %22 = vsyncpa %s21, 0
    loop: start=0, step=1, limit=4
    $region2: #{tpu_custom_call.1} parent=1 // loop_pre_header
      _
    $region3: #{tpu_custom_call.1} parent=1 // loop_header
      %s24 = sphi 0, %s28
      %p25 = scmp.ge.s32.totalorder %s24, 4
      %s34 = sphi 0, %s36
      %s37 = sphi 0, %s34
      %s38 = sphi 0, %s37
      %s54 = sphi 0, %s38
      %s58 = sphi 0, %s58
      %s60 = sphi 0, %s58
      %s61 = sphi 0, %s60
      %s75 = sphi 0, %s61
      %s79 = sphi 0, %s79
      %s81 = sphi 0, %s79
      %s82 = sphi 0, %s81
      %s96 = sphi 0, %s82
      %s100 = sphi 0, %s100
      %s102 = sphi 0, %s100
      %s103 = sphi 0, %s102
      %s117 = sphi 0, %s103
      %s121 = sphi 0, %s121
      %s123 = sphi 0, %s121
      %s124 = sphi 0, %s123
      %s138 = sphi 0, %s124
      %s144 = sphi 0, %s146
      %s147 = sphi 0, %s144
      %s148 = sphi 0, %s147
      %s164 = sphi 0, %s148
      %s170 = sphi 0, %s172
      %s173 = sphi 0, %s170
      %s174 = sphi 0, %s173
      %s190 = sphi 0, %s174
    $region4: #{tpu_custom_call.1} parent=1 // loop_header_branch
      %27 = sbr.rel (%p25) target = $region8
    $region5: #{tpu_custom_call.1} parent=1 // loop_body
      %s29 = ssub.s32 %s24, 1
      %s30 = ssub.s32 %s24, 2
      %s31 = sadd.s32 %s24, 1
      %s32 = ssub.s32 %s24, %s31
      %p33 = scmp.eq.s32.totalorder %s32, 0
      %s35 = sadd.s32 %s34, 1
      %s36 = scalar_select %p33, %s34, %s35
      %p39 = pneg %p33
      %p40 = scmp.eq.s32.totalorder %s24, 1
      %p41 = por %p39, %p40
      %p42 = scmp.ne.s32.totalorder %s34, %s37
      %p43 = scmp.eq.s32.totalorder %s24, 0
      %p44 = por %p42, %p43
      %p45 = scmp.ne.s32.totalorder %s34, %s37
      %p46 = scmp.eq.s32.totalorder %s29, 1
      %p47 = por %p45, %p46
      %p48 = scmp.ne.s32.totalorder %s37, %s38
      %p49 = scmp.eq.s32.totalorder %s29, 0
      %p50 = por %p48, %p49
      %p51 = scmp.ne.s32.totalorder %s37, %s38
      %p52 = scmp.eq.s32.totalorder %s30, 1
      %p53 = por %p51, %p52
      %p55 = scmp.ne.s32.totalorder %s38, %s54
      %p56 = scmp.eq.s32.totalorder %s30, 0
      %p57 = por %p55, %p56
      %s59 = sadd.s32 %s58, 1
      %p62 = scmp.eq.s32.totalorder %s24, 1
      %p63 = scmp.ne.s32.totalorder %s58, %s60
      %p64 = scmp.eq.s32.totalorder %s24, 0
      %p65 = por %p63, %p64
      %p66 = scmp.ne.s32.totalorder %s58, %s60
      %p67 = scmp.eq.s32.totalorder %s29, 1
      %p68 = por %p66, %p67
      %p69 = scmp.ne.s32.totalorder %s60, %s61
      %p70 = scmp.eq.s32.totalorder %s29, 0
      %p71 = por %p69, %p70
      %p72 = scmp.ne.s32.totalorder %s60, %s61
      %p73 = scmp.eq.s32.totalorder %s30, 1
      %p74 = por %p72, %p73
      %p76 = scmp.ne.s32.totalorder %s61, %s75
      %p77 = scmp.eq.s32.totalorder %s30, 0
      %p78 = por %p76, %p77
      %s80 = sadd.s32 %s79, 1
      %p83 = scmp.eq.s32.totalorder %s24, 1
      %p84 = scmp.ne.s32.totalorder %s79, %s81
      %p85 = scmp.eq.s32.totalorder %s24, 0
      %p86 = por %p84, %p85
      %p87 = scmp.ne.s32.totalorder %s79, %s81
      %p88 = scmp.eq.s32.totalorder %s29, 1
      %p89 = por %p87, %p88
      %p90 = scmp.ne.s32.totalorder %s81, %s82
      %p91 = scmp.eq.s32.totalorder %s29, 0
      %p92 = por %p90, %p91
      %p93 = scmp.ne.s32.totalorder %s81, %s82
      %p94 = scmp.eq.s32.totalorder %s30, 1
      %p95 = por %p93, %p94
      %p97 = scmp.ne.s32.totalorder %s82, %s96
      %p98 = scmp.eq.s32.totalorder %s30, 0
      %p99 = por %p97, %p98
      %s101 = sadd.s32 %s100, 1
      %p104 = scmp.eq.s32.totalorder %s24, 1
      %p105 = scmp.ne.s32.totalorder %s100, %s102
      %p106 = scmp.eq.s32.totalorder %s24, 0
      %p107 = por %p105, %p106
      %p108 = scmp.ne.s32.totalorder %s100, %s102
      %p109 = scmp.eq.s32.totalorder %s29, 1
      %p110 = por %p108, %p109
      %p111 = scmp.ne.s32.totalorder %s102, %s103
      %p112 = scmp.eq.s32.totalorder %s29, 0
      %p113 = por %p111, %p112
      %p114 = scmp.ne.s32.totalorder %s102, %s103
      %p115 = scmp.eq.s32.totalorder %s30, 1
      %p116 = por %p114, %p115
      %p118 = scmp.ne.s32.totalorder %s103, %s117
      %p119 = scmp.eq.s32.totalorder %s30, 0
      %p120 = por %p118, %p119
      %s122 = sadd.s32 %s121, 1
      %p125 = scmp.eq.s32.totalorder %s24, 1
      %p126 = scmp.ne.s32.totalorder %s121, %s123
      %p127 = scmp.eq.s32.totalorder %s24, 0
      %p128 = por %p126, %p127
      %p129 = scmp.ne.s32.totalorder %s121, %s123
      %p130 = scmp.eq.s32.totalorder %s29, 1
      %p131 = por %p129, %p130
      %p132 = scmp.ne.s32.totalorder %s123, %s124
      %p133 = scmp.eq.s32.totalorder %s29, 0
      %p134 = por %p132, %p133
      %p135 = scmp.ne.s32.totalorder %s123, %s124
      %p136 = scmp.eq.s32.totalorder %s30, 1
      %p137 = por %p135, %p136
      %p139 = scmp.ne.s32.totalorder %s124, %s138
      %p140 = scmp.eq.s32.totalorder %s30, 0
      %p141 = por %p139, %p140
      %s142 = ssub.s32 %s24, %s31
      %p143 = scmp.eq.s32.totalorder %s142, 0
      %s145 = sadd.s32 %s144, 1
      %s146 = scalar_select %p143, %s144, %s145
      %p149 = pneg %p143
      %p150 = scmp.eq.s32.totalorder %s24, 1
      %p151 = por %p149, %p150
      %p152 = scmp.ne.s32.totalorder %s144, %s147
      %p153 = scmp.eq.s32.totalorder %s24, 0
      %p154 = por %p152, %p153
      %p155 = scmp.ne.s32.totalorder %s144, %s147
      %p156 = scmp.eq.s32.totalorder %s29, 1
      %p157 = por %p155, %p156
      %p158 = scmp.ne.s32.totalorder %s147, %s148
      %p159 = scmp.eq.s32.totalorder %s29, 0
      %p160 = por %p158, %p159
      %p161 = scmp.ne.s32.totalorder %s147, %s148
      %p162 = scmp.eq.s32.totalorder %s30, 1
      %p163 = por %p161, %p162
      %p165 = scmp.ne.s32.totalorder %s148, %s164
      %p166 = scmp.eq.s32.totalorder %s30, 0
      %p167 = por %p165, %p166
      %s168 = ssub.s32 %s24, %s31
      %p169 = scmp.eq.s32.totalorder %s168, 0
      %s171 = sadd.s32 %s170, 1
      %s172 = scalar_select %p169, %s170, %s171
      %p175 = pneg %p169
      %p176 = scmp.eq.s32.totalorder %s24, 1
      %p177 = por %p175, %p176
      %p178 = scmp.ne.s32.totalorder %s170, %s173
      %p179 = scmp.eq.s32.totalorder %s24, 0
      %p180 = por %p178, %p179
      %p181 = scmp.ne.s32.totalorder %s170, %s173
      %p182 = scmp.eq.s32.totalorder %s29, 1
      %p183 = por %p181, %p182
      %p184 = scmp.ne.s32.totalorder %s173, %s174
      %p185 = scmp.eq.s32.totalorder %s29, 0
      %p186 = por %p184, %p185
      %p187 = scmp.ne.s32.totalorder %s173, %s174
      %p188 = scmp.eq.s32.totalorder %s30, 1
      %p189 = por %p187, %p188
      %p191 = scmp.ne.s32.totalorder %s174, %s190
      %p192 = scmp.eq.s32.totalorder %s30, 0
      %p193 = por %p191, %p192
      %p194 = scmp.le.s32.totalorder 1, %s24
      %p195 = scmp.lt.s32.totalorder %s24, 3
      %p196 = pnand %p194, %p195
      %p197 = pneg %p196
      // Predicated region
      $region9: #{tpu_custom_call.1} parent=5 // pred_check
        _
      $region10: #{tpu_custom_call.1} parent=5 // pred_check_branch
        %199 = sbr.rel (%p196) target = $region12
      $region11: #{tpu_custom_call.1} parent=5 // pred_region
        %s200 = ssub.s32 %s24, 1
        // Predicated region
        $region13: #{tpu_custom_call.1} parent=11 // pred_check
          %p201 = pneg %p71
        $region14: #{tpu_custom_call.1} parent=11 // pred_check_branch
          %203 = sbr.rel (%p201) target = $region16
        $region15: #{tpu_custom_call.1} parent=11 // pred_region
          _
        $region16: #{tpu_custom_call.1} parent=11 // pred_fallthru
          _
        // Predicated region
        $region17: #{tpu_custom_call.1} parent=11 // pred_check
          %p204 = pneg %p92
        $region18: #{tpu_custom_call.1} parent=11 // pred_check_branch
          %206 = sbr.rel (%p204) target = $region20
        $region19: #{tpu_custom_call.1} parent=11 // pred_region
          _
        $region20: #{tpu_custom_call.1} parent=11 // pred_fallthru
          _
        // Predicated region
        $region21: #{tpu_custom_call.1} parent=11 // pred_check
          %p207 = pneg %p113
        $region22: #{tpu_custom_call.1} parent=11 // pred_check_branch
          %209 = sbr.rel (%p207) target = $region24
        $region23: #{tpu_custom_call.1} parent=11 // pred_region
          _
        $region24: #{tpu_custom_call.1} parent=11 // pred_fallthru
          _
        // Predicated region
        $region25: #{tpu_custom_call.1} parent=11 // pred_check
          %p210 = pneg %p134
        $region26: #{tpu_custom_call.1} parent=11 // pred_check_branch
          %212 = sbr.rel (%p210) target = $region28
        $region27: #{tpu_custom_call.1} parent=11 // pred_region
          _
        $region28: #{tpu_custom_call.1} parent=11 // pred_fallthru
          _
      $region12: #{tpu_custom_call.1} parent=5 // pred_fallthru
        _
      %p213 = scmp.lt.s32.totalorder %s24, 2
      // Predicated region
      $region29: #{tpu_custom_call.1} parent=5 // pred_check
        %p214 = pneg %p213
      $region30: #{tpu_custom_call.1} parent=5 // pred_check_branch
        %216 = sbr.rel (%p214) target = $region32
      $region31: #{tpu_custom_call.1} parent=5 // pred_region
        // Predicated region
        $region33: #{tpu_custom_call.1} parent=31 // pred_check
          %p217 = pneg %p44
        $region34: #{tpu_custom_call.1} parent=31 // pred_check_branch
          %219 = sbr.rel (%p217) target = $region36
        $region35: #{tpu_custom_call.1} parent=31 // pred_region
          %s220 = sand.u32 %s34, 1
          %s221 = scalar_lea.sflag [#allocation4], %s220
          %s222 = sand.u32 %s34, 1
          %s223 = smul.addr %s222, 64
          %s224 = scalar_lea.vmem [#allocation3], %s223
          %s226 = ssub.s32 1024, 1024
          %227 = vsyncadd %s221, %s226
          %s228 = smul.addr %s24, 8
          %s229 = smul.addr %s228, 128
          %s230 = scalar_lea.hbm %s0, %s229
          %s231 = sshll.u32 %s224, 4
          %s232 = int_to_ptr.vmem [resolvable:$true] %s231
          %237 = dma.hbm_to_vmem [thread:$0]  %s230, 1024, %s232, %s221, 256, 256, 16
        $region36: #{tpu_custom_call.1} parent=31 // pred_fallthru
          _
      $region32: #{tpu_custom_call.1} parent=5 // pred_fallthru
        _
      %p238 = scmp.le.s32.totalorder 1, %s24
      %p239 = scmp.lt.s32.totalorder %s24, 3
      %p240 = pnand %p238, %p239
      %p241 = pneg %p240
      // Predicated region
      $region37: #{tpu_custom_call.1} parent=5 // pred_check
        _
      $region38: #{tpu_custom_call.1} parent=5 // pred_check_branch
        %243 = sbr.rel (%p240) target = $region40
      $region39: #{tpu_custom_call.1} parent=5 // pred_region
        %s244 = ssub.s32 %s24, 1
        %s245 = sand.u32 %s37, 1
        %s246 = scalar_lea.sflag [#allocation4], %s245
        %s247 = sand.u32 %s37, 1
        %s248 = smul.addr %s247, 64
        %s249 = scalar_lea.vmem [#allocation3], %s248
        // Predicated region
        $region41: #{tpu_custom_call.1} parent=39 // pred_check
          %p250 = pneg %p50
        $region42: #{tpu_custom_call.1} parent=39 // pred_check_branch
          %252 = sbr.rel (%p250) target = $region44
        $region43: #{tpu_custom_call.1} parent=39 // pred_region
          %253 = dma.done %s246, 1024
        $region44: #{tpu_custom_call.1} parent=39 // pred_fallthru
          _
        %s254 = sand.u32 %s37, 1
        %s255 = scalar_lea.sflag [#allocation4], %s254
        %s256 = sand.u32 %s37, 1
        %s257 = smul.addr %s256, 64
        %s258 = scalar_lea.vmem [#allocation3], %s257
        %p259 = pneg %p50
        %p260 = pneg %p47
        %p261 = pneg %p71
        %p262 = pneg %p68
        %p263 = pneg %p92
        %p264 = pneg %p89
        %p265 = pneg %p113
        %p266 = pneg %p110
        %p267 = pneg %p134
        %p268 = pneg %p131
        %p269 = pneg %p160
        %p270 = pneg %p157
        %s271 = sand.u32 %s147, 1
        %s272 = scalar_lea.sflag [#allocation5], %s271
        %s273 = sand.u32 %s147, 1
        %s274 = smul.addr %s273, 64
        %s275 = scalar_lea.vmem [#allocation6], %s274
        %p276 = pneg %p186
        %p277 = pneg %p183
        %s278 = sand.u32 %s173, 1
        %s279 = scalar_lea.sflag [#allocation8], %s278
        %s280 = sand.u32 %s173, 1
        %s281 = smul.addr %s280, 2
        %s282 = scalar_lea.vmem [#allocation7], %s281
        %v284 = vld [vmem:[%s249] sm:$0xff]
        %v285 = vld [vmem:[%s249 + $0x8] sm:$0xff]
        %v286 = vld [vmem:[%s249 + $0x10] sm:$0xff]
        %v287 = vld [vmem:[%s249 + $0x18] sm:$0xff]
        %v288 = vld [vmem:[%s249 + $0x20] sm:$0xff]
        %v289 = vld [vmem:[%s249 + $0x28] sm:$0xff]
        %v290 = vld [vmem:[%s249 + $0x30] sm:$0xff]
        %v291 = vld [vmem:[%s249 + $0x38] sm:$0xff]
        %v292 = vld [vmem:[%s2] sm:$0xff]
        %v293 = vld [vmem:[%s2 + $0x8] sm:$0xff]
        %v294 = vld [vmem:[%s2 + $0x10] sm:$0xff]
        %v295 = vld [vmem:[%s2 + $0x18] sm:$0xff]
        %v296 = vld [vmem:[%s1] sm:$0xf]
        %v297 = vld [vmem:[%s1 + $0x4] sm:$0xf]
        %v298 = vld [vmem:[%s1 + $0x8] sm:$0xf]
        %v299 = vld [vmem:[%s1 + $0xc] sm:$0xf]
        %v300 = vpack.c.bf16 %v284, %v284
        %v301 = vpack.c.bf16 %v285, %v285
        %v302 = vmul.f32 %v284, 0.35355338
        %v303 = vmul.f32 %v285, 0.35355338
        %v304 = vpack.c.bf16 %v302, %v302
        %v305 = vpack.c.bf16 %v303, %v303
        %306 = vxpose.xlu0.c.b16.start [1/8] %v300, 128
        %307 = vxpose.xlu0.c.b16.cont [2/8] 0, 128
        %308 = vxpose.xlu0.c.b16.cont [3/8] 0, 128
        %309 = vxpose.xlu0.c.b16.cont [4/8] 0, 128
        %310 = vxpose.xlu0.c.b16.cont [5/8] 0, 128
        %311 = vxpose.xlu0.c.b16.cont [6/8] 0, 128
        %312 = vxpose.xlu0.c.b16.cont [7/8] 0, 128
        %313 = vxpose.xlu0.c.b16.end [8/8] 0, 128
        %v314 = vpop.trf.xlu0
        %v315 = vpop.trf.xlu0
        %v316 = vpop.trf.xlu0
        %v317 = vpop.trf.xlu0
        %v318 = vpop.trf.xlu0
        %v319 = vpop.trf.xlu0
        %v320 = vpop.trf.xlu0
        %v321 = vpop.trf.xlu0
        %322 = vxpose.xlu0.c.b16.start [1/8] %v301, 128
        %323 = vxpose.xlu0.c.b16.cont [2/8] 0, 128
        %324 = vxpose.xlu0.c.b16.cont [3/8] 0, 128
        %325 = vxpose.xlu0.c.b16.cont [4/8] 0, 128
        %326 = vxpose.xlu0.c.b16.cont [5/8] 0, 128
        %327 = vxpose.xlu0.c.b16.cont [6/8] 0, 128
        %328 = vxpose.xlu0.c.b16.cont [7/8] 0, 128
        %329 = vxpose.xlu0.c.b16.end [8/8] 0, 128
        %v330 = vpop.trf.xlu0
        %v331 = vpop.trf.xlu0
        %v332 = vpop.trf.xlu0
        %v333 = vpop.trf.xlu0
        %v334 = vpop.trf.xlu0
        %v335 = vpop.trf.xlu0
        %v336 = vpop.trf.xlu0
        %v337 = vpop.trf.xlu0
        %vm338 = vcmask 64512
        %v340 = vsel %vm338, %v314, 0
        %v343 = vsel %vm338, %v315, 0
        %v346 = vsel %vm338, %v316, 0
        %v349 = vsel %vm338, %v317, 0
        %v352 = vsel %vm338, %v318, 0
        %v355 = vsel %vm338, %v319, 0
        %v358 = vsel %vm338, %v320, 0
        %v361 = vsel %vm338, %v321, 0
        %v364 = vsel %vm338, %v330, 0
        %v367 = vsel %vm338, %v331, 0
        %v370 = vsel %vm338, %v332, 0
        %vm372 = vcmask 1043456
        %v374 = vsel %vm372, %v304, 0
        %v377 = vsel %vm372, %v305, 0
        %379 = vmatprep.subr.bf16.mxu0 %v377
        %380 = vmatpush1.bf16.msra.mxu0 %v374
        %381 = vmatprep.subr.bf16.mxu0 0
        %382 = vmatpush1.bf16.msra.mxu0 0
        %383 = vmatprep.subr.bf16.mxu0 0
        %384 = vmatpush1.bf16.msra.mxu0 0
        %385 = vmatprep.subr.bf16.mxu0 0
        %386 = vmatpush1.bf16.msra.mxu0 0
        %387 = vmatprep.subr.bf16.mxu0 0
        %388 = vmatpush1.bf16.msra.mxu0 0
        %389 = vmatprep.subr.bf16.mxu0 0
        %390 = vmatpush1.bf16.msra.mxu0 0
        %391 = vmatprep.subr.bf16.mxu0 0
        %392 = vmatpush1.bf16.msra.mxu0 0
        %393 = vmatprep.subr.bf16.mxu0 0
        %394 = vmatpush1.bf16.msra.mxu0 0
        %395 = vmatprep.subr.bf16.mxu0 0
        %396 = vmatpush1.bf16.msra.mxu0 0
        %397 = vmatprep.subr.bf16.mxu0 0
        %398 = vmatpush1.bf16.msra.mxu0 0
        %399 = vmatprep.subr.bf16.mxu0 0
        %400 = vmatpush1.bf16.msra.mxu0 0
        %401 = vmatprep.subr.bf16.mxu0 0
        %402 = vmatpush1.bf16.msra.mxu0 0
        %403 = vmatprep.subr.bf16.mxu0 0
        %404 = vmatpush1.bf16.msra.mxu0 0
        %405 = vmatprep.subr.bf16.mxu0 0
        %406 = vmatpush1.bf16.msra.mxu0 0
        %407 = vmatprep.subr.bf16.mxu0 0
        %408 = vmatpush1.bf16.msra.mxu0 0
        %409 = vmatprep.subr.bf16.mxu0 0
        %410 = vmatpush1.bf16.msra.mxu0 0
        %411 = vmatprep.mubr.bf16.mxu0 0
        %412 = vmatmul.mubr.bf16.gmra.mrb[0].mxu0 %v340
        %v413 = vpop.f32.mrb[0].mxu0
        %v414 = vadd.f32 0.0, %v413
        %v415 = vpop.f32.mrb[0].mxu0
        %v416 = vadd.f32 0.0, %v415
        %v417 = vpop.f32.mrb[0].mxu0
        %v418 = vadd.f32 0.0, %v417
        %v419 = vpop.f32.mrb[0].mxu0
        %v420 = vadd.f32 0.0, %v419
        %421 = vmatprep.mubr.bf16.mxu0 0
        %422 = vmatmul.mubr.bf16.gmra.mrb[0].mxu0 %v343
        %v423 = vpop.f32.mrb[0].mxu0
        %v424 = vadd.f32 0.0, %v423
        %v425 = vpop.f32.mrb[0].mxu0
        %v426 = vadd.f32 0.0, %v425
        %v427 = vpop.f32.mrb[0].mxu0
        %v428 = vadd.f32 0.0, %v427
        %v429 = vpop.f32.mrb[0].mxu0
        %v430 = vadd.f32 0.0, %v429
        %431 = vmatprep.mubr.bf16.mxu0 0
        %432 = vmatmul.mubr.bf16.gmra.mrb[0].mxu0 %v346
        %v433 = vpop.f32.mrb[0].mxu0
        %v434 = vadd.f32 0.0, %v433
        %v435 = vpop.f32.mrb[0].mxu0
        %v436 = vadd.f32 0.0, %v435
        %v437 = vpop.f32.mrb[0].mxu0
        %v438 = vadd.f32 0.0, %v437
        %v439 = vpop.f32.mrb[0].mxu0
        %v440 = vadd.f32 0.0, %v439
        %441 = vmatprep.mubr.bf16.mxu0 0
        %442 = vmatmul.mubr.bf16.gmra.mrb[0].mxu0 %v349
        %v443 = vpop.f32.mrb[0].mxu0
        %v444 = vadd.f32 0.0, %v443
        %v445 = vpop.f32.mrb[0].mxu0
        %v446 = vadd.f32 0.0, %v445
        %v447 = vpop.f32.mrb[0].mxu0
        %v448 = vadd.f32 0.0, %v447
        %v449 = vpop.f32.mrb[0].mxu0
        %v450 = vadd.f32 0.0, %v449
        %451 = vmatprep.mubr.bf16.mxu0 0
        %452 = vmatmul.mubr.bf16.gmra.mrb[0].mxu0 %v352
        %v453 = vpop.f32.mrb[0].mxu0
        %v454 = vadd.f32 0.0, %v453
        %v455 = vpop.f32.mrb[0].mxu0
        %v456 = vadd.f32 0.0, %v455
        %v457 = vpop.f32.mrb[0].mxu0
        %v458 = vadd.f32 0.0, %v457
        %v459 = vpop.f32.mrb[0].mxu0
        %v460 = vadd.f32 0.0, %v459
        %461 = vmatprep.mubr.bf16.mxu0 0
        %462 = vmatmul.mubr.bf16.gmra.mrb[0].mxu0 %v355
        %v463 = vpop.f32.mrb[0].mxu0
        %v464 = vadd.f32 0.0, %v463
        %v465 = vpop.f32.mrb[0].mxu0
        %v466 = vadd.f32 0.0, %v465
        %v467 = vpop.f32.mrb[0].mxu0
        %v468 = vadd.f32 0.0, %v467
        %v469 = vpop.f32.mrb[0].mxu0
        %v470 = vadd.f32 0.0, %v469
        %471 = vmatprep.mubr.bf16.mxu0 0
        %472 = vmatmul.mubr.bf16.gmra.mrb[0].mxu0 %v358
        %v473 = vpop.f32.mrb[0].mxu0
        %v474 = vadd.f32 0.0, %v473
        %v475 = vpop.f32.mrb[0].mxu0
        %v476 = vadd.f32 0.0, %v475
        %v477 = vpop.f32.mrb[0].mxu0
        %v478 = vadd.f32 0.0, %v477
        %v479 = vpop.f32.mrb[0].mxu0
        %v480 = vadd.f32 0.0, %v479
        %481 = vmatprep.mubr.bf16.mxu0 0
        %482 = vmatmul.mubr.bf16.gmra.mrb[0].mxu0 %v361
        %v483 = vpop.f32.mrb[0].mxu0
        %v484 = vadd.f32 0.0, %v483
        %v485 = vpop.f32.mrb[0].mxu0
        %v486 = vadd.f32 0.0, %v485
        %v487 = vpop.f32.mrb[0].mxu0
        %v488 = vadd.f32 0.0, %v487
        %v489 = vpop.f32.mrb[0].mxu0
        %v490 = vadd.f32 0.0, %v489
        %491 = vmatprep.mubr.bf16.mxu0 0
        %492 = vmatmul.mubr.bf16.gmra.mrb[0].mxu0 %v364
        %v493 = vpop.f32.mrb[0].mxu0
        %v494 = vadd.f32 0.0, %v493
        %v495 = vpop.f32.mrb[0].mxu0
        %v496 = vadd.f32 0.0, %v495
        %v497 = vpop.f32.mrb[0].mxu0
        %v498 = vadd.f32 0.0, %v497
        %v499 = vpop.f32.mrb[0].mxu0
        %v500 = vadd.f32 0.0, %v499
        %501 = vmatprep.mubr.bf16.mxu0 0
        %502 = vmatmul.mubr.bf16.gmra.mrb[0].mxu0 %v367
        %v503 = vpop.f32.mrb[0].mxu0
        %v504 = vadd.f32 0.0, %v503
        %v505 = vpop.f32.mrb[0].mxu0
        %v506 = vadd.f32 0.0, %v505
        %v507 = vpop.f32.mrb[0].mxu0
        %v508 = vadd.f32 0.0, %v507
        %v509 = vpop.f32.mrb[0].mxu0
        %v510 = vadd.f32 0.0, %v509
        %511 = vmatprep.mubr.bf16.mxu0 0
        %512 = vmatmul.mubr.bf16.gmra.mrb[0].mxu0 %v370
        %v513 = vpop.f32.mrb[0].mxu0
        %v514 = vadd.f32 0.0, %v513
        %v515 = vpop.f32.mrb[0].mxu0
        %v516 = vadd.f32 0.0, %v515
        %v517 = vpop.f32.mrb[0].mxu0
        %v518 = vadd.f32 0.0, %v517
        %v519 = vpop.f32.mrb[0].mxu0
        %v520 = vadd.f32 0.0, %v519
        %521 = vdwg.mxu0
        %v522 = vmax.f32 %v414, %v424
        %v523 = vmax.f32 %v418, %v428
        %v524 = vmax.f32 %v522, %v434
        %v525 = vmax.f32 %v523, %v438
        %v526 = vmax.f32 %v524, %v444
        %v527 = vmax.f32 %v525, %v448
        %v528 = vmax.f32 %v526, %v454
        %v529 = vmax.f32 %v527, %v458
        %v530 = vmax.f32 %v528, %v464
        %v531 = vmax.f32 %v529, %v468
        %v532 = vmax.f32 %v530, %v474
        %v533 = vmax.f32 %v531, %v478
        %v534 = vmax.f32 %v532, %v484
        %v535 = vmax.f32 %v533, %v488
        %v536 = vmax.f32 %v534, %v494
        %v537 = vmax.f32 %v535, %v498
        %v538 = vmax.f32 %v536, %v504
        %v539 = vmax.f32 %v537, %v508
        %v540 = vmax.f32 %v538, %v514
        %v541 = vmax.f32 %v539, %v518
        %v542 = vmax.f32 %v540, %v541
        %v543 = vrot.slane %v542, 4
        %v544 = vmax.f32 %v542, %v543
        %v545 = vrot.slane %v544, 2
        %v546 = vmax.f32 %v544, %v545
        %v547 = vrot.slane %v546, 1
        %v548 = vmax.f32 %v546, %v547
        %vm549 = vcmask 392192
        %v550 = vsel %vm549, %v416, -inf
        %v551 = vsel %vm549, %v420, -inf
        %v552 = vsel %vm549, %v426, -inf
        %v553 = vmax.f32 %v550, %v552
        %v554 = vsel %vm549, %v430, -inf
        %v555 = vmax.f32 %v551, %v554
        %v556 = vsel %vm549, %v436, -inf
        %v557 = vmax.f32 %v553, %v556
        %v558 = vsel %vm549, %v440, -inf
        %v559 = vmax.f32 %v555, %v558
        %v560 = vsel %vm549, %v446, -inf
        %v561 = vmax.f32 %v557, %v560
        %v562 = vsel %vm549, %v450, -inf
        %v563 = vmax.f32 %v559, %v562
        %v564 = vsel %vm549, %v456, -inf
        %v565 = vmax.f32 %v561, %v564
        %v566 = vsel %vm549, %v460, -inf
        %v567 = vmax.f32 %v563, %v566
        %v568 = vsel %vm549, %v466, -inf
        %v569 = vmax.f32 %v565, %v568
        %v570 = vsel %vm549, %v470, -inf
        %v571 = vmax.f32 %v567, %v570
        %v572 = vsel %vm549, %v476, -inf
        %v573 = vmax.f32 %v569, %v572
        %v574 = vsel %vm549, %v480, -inf
        %v575 = vmax.f32 %v571, %v574
        %v576 = vsel %vm549, %v486, -inf
        %v577 = vmax.f32 %v573, %v576
        %v578 = vsel %vm549, %v490, -inf
        %v579 = vmax.f32 %v575, %v578
        %v580 = vsel %vm549, %v496, -inf
        %v581 = vmax.f32 %v577, %v580
        %v582 = vsel %vm549, %v500, -inf
        %v583 = vmax.f32 %v579, %v582
        %v584 = vsel %vm549, %v506, -inf
        %v585 = vmax.f32 %v581, %v584
        %v586 = vsel %vm549, %v510, -inf
        %v587 = vmax.f32 %v583, %v586
        %v588 = vsel %vm549, %v516, -inf
        %v589 = vmax.f32 %v585, %v588
        %v590 = vsel %vm549, %v520, -inf
        %v591 = vmax.f32 %v587, %v590
        %v592 = vmax.f32 %v589, %v591
        %v593 = vrot.slane %v592, 4
        %v594 = vmax.f32 %v592, %v593
        %v595 = vrot.slane %v594, 2
        %v596 = vmax.f32 %v594, %v595
        %v597 = vrot.slane %v596, 1
        %v598 = vmax.f32 %v596, %v597
        %v599 = vsub.f32 %v414, %v548
        %v600 = vsub.f32 %v416, %v598
        %v601 = vsub.f32 %v418, %v548
        %v602 = vsub.f32 %v420, %v598
        %v603 = vsub.f32 %v424, %v548
        %v604 = vsub.f32 %v426, %v598
        %v605 = vsub.f32 %v428, %v548
        %v606 = vsub.f32 %v430, %v598
        %v607 = vsub.f32 %v434, %v548
        %v608 = vsub.f32 %v436, %v598
        %v609 = vsub.f32 %v438, %v548
        %v610 = vsub.f32 %v440, %v598
        %v611 = vsub.f32 %v444, %v548
        %v612 = vsub.f32 %v446, %v598
        %v613 = vsub.f32 %v448, %v548
        %v614 = vsub.f32 %v450, %v598
        %v615 = vsub.f32 %v454, %v548
        %v616 = vsub.f32 %v456, %v598
        %v617 = vsub.f32 %v458, %v548
        %v618 = vsub.f32 %v460, %v598
        %v619 = vsub.f32 %v464, %v548
        %v620 = vsub.f32 %v466, %v598
        %v621 = vsub.f32 %v468, %v548
        %v622 = vsub.f32 %v470, %v598
        %v623 = vsub.f32 %v474, %v548
        %v624 = vsub.f32 %v476, %v598
        %v625 = vsub.f32 %v478, %v548
        %v626 = vsub.f32 %v480, %v598
        %v627 = vsub.f32 %v484, %v548
        %v628 = vsub.f32 %v486, %v598
        %v629 = vsub.f32 %v488, %v548
        %v630 = vsub.f32 %v490, %v598
        %v631 = vsub.f32 %v494, %v548
        %v632 = vsub.f32 %v496, %v598
        %v633 = vsub.f32 %v498, %v548
        %v634 = vsub.f32 %v500, %v598
        %v635 = vsub.f32 %v504, %v548
        %v636 = vsub.f32 %v506, %v598
        %v637 = vsub.f32 %v508, %v548
        %v638 = vsub.f32 %v510, %v598
        %v639 = vsub.f32 %v514, %v548
        %v640 = vsub.f32 %v516, %v598
        %v641 = vsub.f32 %v518, %v548
        %v642 = vsub.f32 %v520, %v598
        %v643 = vmul.f32 %v599, 1.442695
        %v644 = vpow.pop %v643
        %v645 = vmul.f32 %v600, 1.442695
        %v646 = vpow.pop %v645
        %v647 = vmul.f32 %v601, 1.442695
        %v648 = vpow.pop %v647
        %v649 = vmul.f32 %v602, 1.442695
        %v650 = vpow.pop %v649
        %v651 = vmul.f32 %v603, 1.442695
        %v652 = vpow.pop %v651
        %v653 = vmul.f32 %v604, 1.442695
        %v654 = vpow.pop %v653
        %v655 = vmul.f32 %v605, 1.442695
        %v656 = vpow.pop %v655
        %v657 = vmul.f32 %v606, 1.442695
        %v658 = vpow.pop %v657
        %v659 = vmul.f32 %v607, 1.442695
        %v660 = vpow.pop %v659
        %v661 = vmul.f32 %v608, 1.442695
        %v662 = vpow.pop %v661
        %v663 = vmul.f32 %v609, 1.442695
        %v664 = vpow.pop %v663
        %v665 = vmul.f32 %v610, 1.442695
        %v666 = vpow.pop %v665
        %v667 = vmul.f32 %v611, 1.442695
        %v668 = vpow.pop %v667
        %v669 = vmul.f32 %v612, 1.442695
        %v670 = vpow.pop %v669
        %v671 = vmul.f32 %v613, 1.442695
        %v672 = vpow.pop %v671
        %v673 = vmul.f32 %v614, 1.442695
        %v674 = vpow.pop %v673
        %v675 = vmul.f32 %v615, 1.442695
        %v676 = vpow.pop %v675
        %v677 = vmul.f32 %v616, 1.442695
        %v678 = vpow.pop %v677
        %v679 = vmul.f32 %v617, 1.442695
        %v680 = vpow.pop %v679
        %v681 = vmul.f32 %v618, 1.442695
        %v682 = vpow.pop %v681
        %v683 = vmul.f32 %v619, 1.442695
        %v684 = vpow.pop %v683
        %v685 = vmul.f32 %v620, 1.442695
        %v686 = vpow.pop %v685
        %v687 = vmul.f32 %v621, 1.442695
        %v688 = vpow.pop %v687
        %v689 = vmul.f32 %v622, 1.442695
        %v690 = vpow.pop %v689
        %v691 = vmul.f32 %v623, 1.442695
        %v692 = vpow.pop %v691
        %v693 = vmul.f32 %v624, 1.442695
        %v694 = vpow.pop %v693
        %v695 = vmul.f32 %v625, 1.442695
        %v696 = vpow.pop %v695
        %v697 = vmul.f32 %v626, 1.442695
        %v698 = vpow.pop %v697
        %v699 = vmul.f32 %v627, 1.442695
        %v700 = vpow.pop %v699
        %v701 = vmul.f32 %v628, 1.442695
        %v702 = vpow.pop %v701
        %v703 = vmul.f32 %v629, 1.442695
        %v704 = vpow.pop %v703
        %v705 = vmul.f32 %v630, 1.442695
        %v706 = vpow.pop %v705
        %v707 = vmul.f32 %v631, 1.442695
        %v708 = vpow.pop %v707
        %v709 = vmul.f32 %v632, 1.442695
        %v710 = vpow.pop %v709
        %v711 = vmul.f32 %v633, 1.442695
        %v712 = vpow.pop %v711
        %v713 = vmul.f32 %v634, 1.442695
        %v714 = vpow.pop %v713
        %v715 = vmul.f32 %v635, 1.442695
        %v716 = vpow.pop %v715
        %v717 = vmul.f32 %v636, 1.442695
        %v718 = vpow.pop %v717
        %v719 = vmul.f32 %v637, 1.442695
        %v720 = vpow.pop %v719
        %v721 = vmul.f32 %v638, 1.442695
        %v722 = vpow.pop %v721
        %v723 = vmul.f32 %v639, 1.442695
        %v724 = vpow.pop %v723
        %v725 = vmul.f32 %v640, 1.442695
        %v726 = vpow.pop %v725
        %v727 = vmul.f32 %v641, 1.442695
        %v728 = vpow.pop %v727
        %v729 = vmul.f32 %v642, 1.442695
        %v730 = vpow.pop %v729
        %v731 = vadd.f32 %v644, %v648
        %v732 = vadd.f32 %v731, %v652
        %v733 = vadd.f32 %v732, %v656
        %v734 = vadd.f32 %v733, %v660
        %v735 = vadd.f32 %v734, %v664
        %v736 = vadd.f32 %v735, %v668
        %v737 = vadd.f32 %v736, %v672
        %v738 = vadd.f32 %v737, %v676
        %v739 = vadd.f32 %v738, %v680
        %v740 = vadd.f32 %v739, %v684
        %v741 = vadd.f32 %v740, %v688
        %v742 = vadd.f32 %v741, %v692
        %v743 = vadd.f32 %v742, %v696
        %v744 = vadd.f32 %v743, %v700
        %v745 = vadd.f32 %v744, %v704
        %v746 = vadd.f32 %v745, %v708
        %v747 = vadd.f32 %v746, %v712
        %v748 = vadd.f32 %v747, %v716
        %v749 = vadd.f32 %v748, %v720
        %v750 = vadd.f32 %v749, %v724
        %v751 = vadd.f32 %v750, %v728
        %v752 = vrot.slane %v751, 4
        %v753 = vadd.f32 %v751, %v752
        %v754 = vrot.slane %v753, 2
        %v755 = vadd.f32 %v753, %v754
        %v756 = vrot.slane %v755, 1
        %v757 = vadd.f32 %v755, %v756
        %v758 = vsel %vm549, %v646, 0.0
        %v759 = vsel %vm549, %v650, 0.0
        %v760 = vadd.f32 %v758, %v759
        %v761 = vsel %vm549, %v654, 0.0
        %v762 = vadd.f32 %v760, %v761
        %v763 = vsel %vm549, %v658, 0.0
        %v764 = vadd.f32 %v762, %v763
        %v765 = vsel %vm549, %v662, 0.0
        %v766 = vadd.f32 %v764, %v765
        %v767 = vsel %vm549, %v666, 0.0
        %v768 = vadd.f32 %v766, %v767
        %v769 = vsel %vm549, %v670, 0.0
        %v770 = vadd.f32 %v768, %v769
        %v771 = vsel %vm549, %v674, 0.0
        %v772 = vadd.f32 %v770, %v771
        %v773 = vsel %vm549, %v678, 0.0
        %v774 = vadd.f32 %v772, %v773
        %v775 = vsel %vm549, %v682, 0.0
        %v776 = vadd.f32 %v774, %v775
        %v777 = vsel %vm549, %v686, 0.0
        %v778 = vadd.f32 %v776, %v777
        %v779 = vsel %vm549, %v690, 0.0
        %v780 = vadd.f32 %v778, %v779
        %v781 = vsel %vm549, %v694, 0.0
        %v782 = vadd.f32 %v780, %v781
        %v783 = vsel %vm549, %v698, 0.0
        %v784 = vadd.f32 %v782, %v783
        %v785 = vsel %vm549, %v702, 0.0
        %v786 = vadd.f32 %v784, %v785
        %v787 = vsel %vm549, %v706, 0.0
        %v788 = vadd.f32 %v786, %v787
        %v789 = vsel %vm549, %v710, 0.0
        %v790 = vadd.f32 %v788, %v789
        %v791 = vsel %vm549, %v714, 0.0
        %v792 = vadd.f32 %v790, %v791
        %v793 = vsel %vm549, %v718, 0.0
        %v794 = vadd.f32 %v792, %v793
        %v795 = vsel %vm549, %v722, 0.0
        %v796 = vadd.f32 %v794, %v795
        %v797 = vsel %vm549, %v726, 0.0
        %v798 = vadd.f32 %v796, %v797
        %v799 = vsel %vm549, %v730, 0.0
        %v800 = vadd.f32 %v798, %v799
        %v801 = vrot.slane %v800, 4
        %v802 = vadd.f32 %v800, %v801
        %v803 = vrot.slane %v802, 2
        %v804 = vadd.f32 %v802, %v803
        %v805 = vrot.slane %v804, 1
        %v806 = vadd.f32 %v804, %v805
        %v807 = vrcp.pop %v757
        %v808 = vmul.f32 1.0, %v807
        %v809 = vrcp.pop %v806
        %v810 = vmul.f32 1.0, %v809
        %v811 = vpack.c.bf16 %v648, %v644
        %v812 = vpack.c.bf16 %v650, %v646
        %v813 = vpack.c.bf16 %v656, %v652
        %v814 = vpack.c.bf16 %v658, %v654
        %v815 = vpack.c.bf16 %v664, %v660
        %v816 = vpack.c.bf16 %v666, %v662
        %v817 = vpack.c.bf16 %v672, %v668
        %v818 = vpack.c.bf16 %v674, %v670
        %v819 = vpack.c.bf16 %v680, %v676
        %v820 = vpack.c.bf16 %v682, %v678
        %v821 = vpack.c.bf16 %v688, %v684
        %v822 = vpack.c.bf16 %v690, %v686
        %v823 = vpack.c.bf16 %v696, %v692
        %v824 = vpack.c.bf16 %v698, %v694
        %v825 = vpack.c.bf16 %v704, %v700
        %v826 = vpack.c.bf16 %v706, %v702
        %v827 = vpack.c.bf16 %v712, %v708
        %v828 = vpack.c.bf16 %v714, %v710
        %v829 = vpack.c.bf16 %v720, %v716
        %v830 = vpack.c.bf16 %v722, %v718
        %v831 = vpack.c.bf16 %v728, %v724
        %v832 = vpack.c.bf16 %v730, %v726
        %v834 = vsel %vm549, %v301, 0
        %836 = vmatprep.subr.bf16.mxu0 %v812
        %837 = vmatpush1.bf16.msra.mxu0 %v811
        %838 = vmatprep.subr.bf16.mxu0 %v814
        %839 = vmatpush1.bf16.msra.mxu0 %v813
        %840 = vmatprep.subr.bf16.mxu0 %v816
        %841 = vmatpush1.bf16.msra.mxu0 %v815
        %842 = vmatprep.subr.bf16.mxu0 %v818
        %843 = vmatpush1.bf16.msra.mxu0 %v817
        %844 = vmatprep.subr.bf16.mxu0 %v820
        %845 = vmatpush1.bf16.msra.mxu0 %v819
        %846 = vmatprep.subr.bf16.mxu0 %v822
        %847 = vmatpush1.bf16.msra.mxu0 %v821
        %848 = vmatprep.subr.bf16.mxu0 %v824
        %849 = vmatpush1.bf16.msra.mxu0 %v823
        %850 = vmatprep.subr.bf16.mxu0 %v826
        %851 = vmatpush1.bf16.msra.mxu0 %v825
        %852 = vmatprep.subr.bf16.mxu0 %v828
        %853 = vmatpush1.bf16.msra.mxu0 %v827
        %854 = vmatprep.subr.bf16.mxu0 %v830
        %855 = vmatpush1.bf16.msra.mxu0 %v829
        %856 = vmatprep.subr.bf16.mxu0 %v832
        %857 = vmatpush1.bf16.msra.mxu0 %v831
        %858 = vmatprep.subr.bf16.mxu0 0
        %859 = vmatpush1.bf16.msra.mxu0 0
        %860 = vmatprep.subr.bf16.mxu0 0
        %861 = vmatpush1.bf16.msra.mxu0 0
        %862 = vmatprep.subr.bf16.mxu0 0
        %863 = vmatpush1.bf16.msra.mxu0 0
        %864 = vmatprep.subr.bf16.mxu0 0
        %865 = vmatpush1.bf16.msra.mxu0 0
        %866 = vmatprep.subr.bf16.mxu0 0
        %867 = vmatpush1.bf16.msra.mxu0 0
        %868 = vmatprep.mubr.bf16.mxu0 %v834
        %869 = vmatmul.mubr.bf16.gmra.mrb[0].mxu0 %v300
        %v870 = vpop.f32.mrb[0].mxu0
        %v871 = vadd.f32 0.0, %v870
        %v872 = vpop.f32.mrb[0].mxu0
        %v873 = vadd.f32 0.0, %v872
        %v874 = vpop.f32.mrb[0].mxu0
        %v875 = vpop.f32.mrb[0].mxu0
        %876 = vdwg.mxu0
        %v877 = vmul.f32 %v871, %v808
        %v878 = vmul.f32 %v873, %v810
        %v879 = vpack.c.bf16 %v286, %v286
        %v880 = vpack.c.bf16 %v287, %v287
        %v881 = vmul.f32 %v286, 0.35355338
        %v882 = vmul.f32 %v287, 0.35355338
        %v883 = vpack.c.bf16 %v881, %v881
        %v884 = vpack.c.bf16 %v882, %v882
        %885 = vxpose.xlu0.c.b16.start [1/8] %v879, 128
        %886 = vxpose.xlu0.c.b16.cont [2/8] 0, 128
        %887 = vxpose.xlu0.c.b16.cont [3/8] 0, 128
        %888 = vxpose.xlu0.c.b16.cont [4/8] 0, 128
        %889 = vxpose.xlu0.c.b16.cont [5/8] 0, 128
        %890 = vxpose.xlu0.c.b16.cont [6/8] 0, 128
        %891 = vxpose.xlu0.c.b16.cont [7/8] 0, 128
        %892 = vxpose.xlu0.c.b16.end [8/8] 0, 128
        %v893 = vpop.trf.xlu0
        %v894 = vpop.trf.xlu0
        %v895 = vpop.trf.xlu0
        %v896 = vpop.trf.xlu0
        %v897 = vpop.trf.xlu0
        %v898 = vpop.trf.xlu0
        %v899 = vpop.trf.xlu0
        %v900 = vpop.trf.xlu0
        %901 = vxpose.xlu0.c.b16.start [1/8] %v880, 128
        %902 = vxpose.xlu0.c.b16.cont [2/8] 0, 128
        %903 = vxpose.xlu0.c.b16.cont [3/8] 0, 128
        %904 = vxpose.xlu0.c.b16.cont [4/8] 0, 128
        %905 = vxpose.xlu0.c.b16.cont [5/8] 0, 128
        %906 = vxpose.xlu0.c.b16.cont [6/8] 0, 128
        %907 = vxpose.xlu0.c.b16.cont [7/8] 0, 128
        %908 = vxpose.xlu0.c.b16.end [8/8] 0, 128
        %v909 = vpop.trf.xlu0
        %v910 = vpop.trf.xlu0
        %v911 = vpop.trf.xlu0
        %v912 = vpop.trf.xlu0
        %v913 = vpop.trf.xlu0
        %v914 = vpop.trf.xlu0
        %v915 = vpop.trf.xlu0
        %v916 = vpop.trf.xlu0
        %v918 = vsel %vm338, %v893, 0
        %v921 = vsel %vm338, %v894, 0
        %v924 = vsel %vm338, %v895, 0
        %v927 = vsel %vm338, %v896, 0
        %v930 = vsel %vm338, %v897, 0
        %v933 = vsel %vm338, %v898, 0
        %v936 = vsel %vm338, %v899, 0
        %v939 = vsel %vm338, %v900, 0
        %v942 = vsel %vm338, %v909, 0
        %v945 = vsel %vm338, %v910, 0
        %v948 = vsel %vm338, %v911, 0
        %v951 = vsel %vm372, %v883, 0
        %v954 = vsel %vm372, %v884, 0
        %956 = vmatprep.subr.bf16.mxu0 %v954
        %957 = vmatpush1.bf16.msra.mxu0 %v951
        %958 = vmatprep.subr.bf16.mxu0 0
        %959 = vmatpush1.bf16.msra.mxu0 0
        %960 = vmatprep.subr.bf16.mxu0 0
        %961 = vmatpush1.bf16.msra.mxu0 0
        %962 = vmatprep.subr.bf16.mxu0 0
        %963 = vmatpush1.bf16.msra.mxu0 0
        %964 = vmatprep.subr.bf16.mxu0 0
        %965 = vmatpush1.bf16.msra.mxu0 0
        %966 = vmatprep.subr.bf16.mxu0 0
        %967 = vmatpush1.bf16.msra.mxu0 0
        %968 = vmatprep.subr.bf16.mxu0 0
        %969 = vmatpush1.bf16.msra.mxu0 0
        %970 = vmatprep.subr.bf16.mxu0 0
        %971 = vmatpush1.bf16.msra.mxu0 0
        %972 = vmatprep.subr.bf16.mxu0 0
        %973 = vmatpush1.bf16.msra.mxu0 0
        %974 = vmatprep.subr.bf16.mxu0 0
        %975 = vmatpush1.bf16.msra.mxu0 0
        %976 = vmatprep.subr.bf16.mxu0 0
        %977 = vmatpush1.bf16.msra.mxu0 0
        %978 = vmatprep.subr.bf16.mxu0 0
        %979 = vmatpush1.bf16.msra.mxu0 0
        %980 = vmatprep.subr.bf16.mxu0 0
        %981 = vmatpush1.bf16.msra.mxu0 0
        %982 = vmatprep.subr.bf16.mxu0 0
        %983 = vmatpush1.bf16.msra.mxu0 0
        %984 = vmatprep.subr.bf16.mxu0 0
        %985 = vmatpush1.bf16.msra.mxu0 0
        %986 = vmatprep.subr.bf16.mxu0 0
        %987 = vmatpush1.bf16.msra.mxu0 0
        %988 = vmatprep.mubr.bf16.mxu0 0
        %989 = vmatmul.mubr.bf16.gmra.mrb[0].mxu0 %v918
        %v990 = vpop.f32.mrb[0].mxu0
        %v991 = vadd.f32 0.0, %v990
        %v992 = vpop.f32.mrb[0].mxu0
        %v993 = vadd.f32 0.0, %v992
        %v994 = vpop.f32.mrb[0].mxu0
        %v995 = vadd.f32 0.0, %v994
        %v996 = vpop.f32.mrb[0].mxu0
        %v997 = vadd.f32 0.0, %v996
        %998 = vmatprep.mubr.bf16.mxu0 0
        %999 = vmatmul.mubr.bf16.gmra.mrb[0].mxu0 %v921
        %v1000 = vpop.f32.mrb[0].mxu0
        %v1001 = vadd.f32 0.0, %v1000
        %v1002 = vpop.f32.mrb[0].mxu0
        %v1003 = vadd.f32 0.0, %v1002
        %v1004 = vpop.f32.mrb[0].mxu0
        %v1005 = vadd.f32 0.0, %v1004
        %v1006 = vpop.f32.mrb[0].mxu0
        %v1007 = vadd.f32 0.0, %v1006
        %1008 = vmatprep.mubr.bf16.mxu0 0
        %1009 = vmatmul.mubr.bf16.gmra.mrb[0].mxu0 %v924
        %v1010 = vpop.f32.mrb[0].mxu0
        %v1011 = vadd.f32 0.0, %v1010
        %v1012 = vpop.f32.mrb[0].mxu0
        %v1013 = vadd.f32 0.0, %v1012
        %v1014 = vpop.f32.mrb[0].mxu0
        %v1015 = vadd.f32 0.0, %v1014
        %v1016 = vpop.f32.mrb[0].mxu0
        %v1017 = vadd.f32 0.0, %v1016
        %1018 = vmatprep.mubr.bf16.mxu0 0
        %1019 = vmatmul.mubr.bf16.gmra.mrb[0].mxu0 %v927
        %v1020 = vpop.f32.mrb[0].mxu0
        %v1021 = vadd.f32 0.0, %v1020
        %v1022 = vpop.f32.mrb[0].mxu0
        %v1023 = vadd.f32 0.0, %v1022
        %v1024 = vpop.f32.mrb[0].mxu0
        %v1025 = vadd.f32 0.0, %v1024
        %v1026 = vpop.f32.mrb[0].mxu0
        %v1027 = vadd.f32 0.0, %v1026
        %1028 = vmatprep.mubr.bf16.mxu0 0
        %1029 = vmatmul.mubr.bf16.gmra.mrb[0].mxu0 %v930
        %v1030 = vpop.f32.mrb[0].mxu0
        %v1031 = vadd.f32 0.0, %v1030
        %v1032 = vpop.f32.mrb[0].mxu0
        %v1033 = vadd.f32 0.0, %v1032
        %v1034 = vpop.f32.mrb[0].mxu0
        %v1035 = vadd.f32 0.0, %v1034
        %v1036 = vpop.f32.mrb[0].mxu0
        %v1037 = vadd.f32 0.0, %v1036
        %1038 = vmatprep.mubr.bf16.mxu0 0
        %1039 = vmatmul.mubr.bf16.gmra.mrb[0].mxu0 %v933
        %v1040 = vpop.f32.mrb[0].mxu0
        %v1041 = vadd.f32 0.0, %v1040
        %v1042 = vpop.f32.mrb[0].mxu0
        %v1043 = vadd.f32 0.0, %v1042
        %v1044 = vpop.f32.mrb[0].mxu0
        %v1045 = vadd.f32 0.0, %v1044
        %v1046 = vpop.f32.mrb[0].mxu0
        %v1047 = vadd.f32 0.0, %v1046
        %1048 = vmatprep.mubr.bf16.mxu0 0
        %1049 = vmatmul.mubr.bf16.gmra.mrb[0].mxu0 %v936
        %v1050 = vpop.f32.mrb[0].mxu0
        %v1051 = vadd.f32 0.0, %v1050
        %v1052 = vpop.f32.mrb[0].mxu0
        %v1053 = vadd.f32 0.0, %v1052
        %v1054 = vpop.f32.mrb[0].mxu0
        %v1055 = vadd.f32 0.0, %v1054
        %v1056 = vpop.f32.mrb[0].mxu0
        %v1057 = vadd.f32 0.0, %v1056
        %1058 = vmatprep.mubr.bf16.mxu0 0
        %1059 = vmatmul.mubr.bf16.gmra.mrb[0].mxu0 %v939
        %v1060 = vpop.f32.mrb[0].mxu0
        %v1061 = vadd.f32 0.0, %v1060
        %v1062 = vpop.f32.mrb[0].mxu0
        %v1063 = vadd.f32 0.0, %v1062
        %v1064 = vpop.f32.mrb[0].mxu0
        %v1065 = vadd.f32 0.0, %v1064
        %v1066 = vpop.f32.mrb[0].mxu0
        %v1067 = vadd.f32 0.0, %v1066
        %1068 = vmatprep.mubr.bf16.mxu0 0
        %1069 = vmatmul.mubr.bf16.gmra.mrb[0].mxu0 %v942
        %v1070 = vpop.f32.mrb[0].mxu0
        %v1071 = vadd.f32 0.0, %v1070
        %v1072 = vpop.f32.mrb[0].mxu0
        %v1073 = vadd.f32 0.0, %v1072
        %v1074 = vpop.f32.mrb[0].mxu0
        %v1075 = vadd.f32 0.0, %v1074
        %v1076 = vpop.f32.mrb[0].mxu0
        %v1077 = vadd.f32 0.0, %v1076
        %1078 = vmatprep.mubr.bf16.mxu0 0
        %1079 = vmatmul.mubr.bf16.gmra.mrb[0].mxu0 %v945
        %v1080 = vpop.f32.mrb[0].mxu0
        %v1081 = vadd.f32 0.0, %v1080
        %v1082 = vpop.f32.mrb[0].mxu0
        %v1083 = vadd.f32 0.0, %v1082
        %v1084 = vpop.f32.mrb[0].mxu0
        %v1085 = vadd.f32 0.0, %v1084
        %v1086 = vpop.f32.mrb[0].mxu0
        %v1087 = vadd.f32 0.0, %v1086
        %1088 = vmatprep.mubr.bf16.mxu0 0
        %1089 = vmatmul.mubr.bf16.gmra.mrb[0].mxu0 %v948
        %v1090 = vpop.f32.mrb[0].mxu0
        %v1091 = vadd.f32 0.0, %v1090
        %v1092 = vpop.f32.mrb[0].mxu0
        %v1093 = vadd.f32 0.0, %v1092
        %v1094 = vpop.f32.mrb[0].mxu0
        %v1095 = vadd.f32 0.0, %v1094
        %v1096 = vpop.f32.mrb[0].mxu0
        %v1097 = vadd.f32 0.0, %v1096
        %1098 = vdwg.mxu0
        %v1099 = vmax.f32 %v991, %v1001
        %v1100 = vmax.f32 %v995, %v1005
        %v1101 = vmax.f32 %v1099, %v1011
        %v1102 = vmax.f32 %v1100, %v1015
        %v1103 = vmax.f32 %v1101, %v1021
        %v1104 = vmax.f32 %v1102, %v1025
        %v1105 = vmax.f32 %v1103, %v1031
        %v1106 = vmax.f32 %v1104, %v1035
        %v1107 = vmax.f32 %v1105, %v1041
        %v1108 = vmax.f32 %v1106, %v1045
        %v1109 = vmax.f32 %v1107, %v1051
        %v1110 = vmax.f32 %v1108, %v1055
        %v1111 = vmax.f32 %v1109, %v1061
        %v1112 = vmax.f32 %v1110, %v1065
        %v1113 = vmax.f32 %v1111, %v1071
        %v1114 = vmax.f32 %v1112, %v1075
        %v1115 = vmax.f32 %v1113, %v1081
        %v1116 = vmax.f32 %v1114, %v1085
        %v1117 = vmax.f32 %v1115, %v1091
        %v1118 = vmax.f32 %v1116, %v1095
        %v1119 = vmax.f32 %v1117, %v1118
        %v1120 = vrot.slane %v1119, 4
        %v1121 = vmax.f32 %v1119, %v1120
        %v1122 = vrot.slane %v1121, 2
        %v1123 = vmax.f32 %v1121, %v1122
        %v1124 = vrot.slane %v1123, 1
        %v1125 = vmax.f32 %v1123, %v1124
        %v1126 = vsel %vm549, %v993, -inf
        %v1127 = vsel %vm549, %v997, -inf
        %v1128 = vsel %vm549, %v1003, -inf
        %v1129 = vmax.f32 %v1126, %v1128
        %v1130 = vsel %vm549, %v1007, -inf
        %v1131 = vmax.f32 %v1127, %v1130
        %v1132 = vsel %vm549, %v1013, -inf
        %v1133 = vmax.f32 %v1129, %v1132
        %v1134 = vsel %vm549, %v1017, -inf
        %v1135 = vmax.f32 %v1131, %v1134
        %v1136 = vsel %vm549, %v1023, -inf
        %v1137 = vmax.f32 %v1133, %v1136
        %v1138 = vsel %vm549, %v1027, -inf
        %v1139 = vmax.f32 %v1135, %v1138
        %v1140 = vsel %vm549, %v1033, -inf
        %v1141 = vmax.f32 %v1137, %v1140
        %v1142 = vsel %vm549, %v1037, -inf
        %v1143 = vmax.f32 %v1139, %v1142
        %v1144 = vsel %vm549, %v1043, -inf
        %v1145 = vmax.f32 %v1141, %v1144
        %v1146 = vsel %vm549, %v1047, -inf
        %v1147 = vmax.f32 %v1143, %v1146
        %v1148 = vsel %vm549, %v1053, -inf
        %v1149 = vmax.f32 %v1145, %v1148
        %v1150 = vsel %vm549, %v1057, -inf
        %v1151 = vmax.f32 %v1147, %v1150
        %v1152 = vsel %vm549, %v1063, -inf
        %v1153 = vmax.f32 %v1149, %v1152
        %v1154 = vsel %vm549, %v1067, -inf
        %v1155 = vmax.f32 %v1151, %v1154
        %v1156 = vsel %vm549, %v1073, -inf
        %v1157 = vmax.f32 %v1153, %v1156
        %v1158 = vsel %vm549, %v1077, -inf
        %v1159 = vmax.f32 %v1155, %v1158
        %v1160 = vsel %vm549, %v1083, -inf
        %v1161 = vmax.f32 %v1157, %v1160
        %v1162 = vsel %vm549, %v1087, -inf
        %v1163 = vmax.f32 %v1159, %v1162
        %v1164 = vsel %vm549, %v1093, -inf
        %v1165 = vmax.f32 %v1161, %v1164
        %v1166 = vsel %vm549, %v1097, -inf
        %v1167 = vmax.f32 %v1163, %v1166
        %v1168 = vmax.f32 %v1165, %v1167
        %v1169 = vrot.slane %v1168, 4
        %v1170 = vmax.f32 %v1168, %v1169
        %v1171 = vrot.slane %v1170, 2
        %v1172 = vmax.f32 %v1170, %v1171
        %v1173 = vrot.slane %v1172, 1
        %v1174 = vmax.f32 %v1172, %v1173
        %v1175 = vsub.f32 %v991, %v1125
        %v1176 = vsub.f32 %v993, %v1174
        %v1177 = vsub.f32 %v995, %v1125
        %v1178 = vsub.f32 %v997, %v1174
        %v1179 = vsub.f32 %v1001, %v1125
        %v1180 = vsub.f32 %v1003, %v1174
        %v1181 = vsub.f32 %v1005, %v1125
        %v1182 = vsub.f32 %v1007, %v1174
        %v1183 = vsub.f32 %v1011, %v1125
        %v1184 = vsub.f32 %v1013, %v1174
        %v1185 = vsub.f32 %v1015, %v1125
        %v1186 = vsub.f32 %v1017, %v1174
        %v1187 = vsub.f32 %v1021, %v1125
        %v1188 = vsub.f32 %v1023, %v1174
        %v1189 = vsub.f32 %v1025, %v1125
        %v1190 = vsub.f32 %v1027, %v1174
        %v1191 = vsub.f32 %v1031, %v1125
        %v1192 = vsub.f32 %v1033, %v1174
        %v1193 = vsub.f32 %v1035, %v1125
        %v1194 = vsub.f32 %v1037, %v1174
        %v1195 = vsub.f32 %v1041, %v1125
        %v1196 = vsub.f32 %v1043, %v1174
        %v1197 = vsub.f32 %v1045, %v1125
        %v1198 = vsub.f32 %v1047, %v1174
        %v1199 = vsub.f32 %v1051, %v1125
        %v1200 = vsub.f32 %v1053, %v1174
        %v1201 = vsub.f32 %v1055, %v1125
        %v1202 = vsub.f32 %v1057, %v1174
        %v1203 = vsub.f32 %v1061, %v1125
        %v1204 = vsub.f32 %v1063, %v1174
        %v1205 = vsub.f32 %v1065, %v1125
        %v1206 = vsub.f32 %v1067, %v1174
        %v1207 = vsub.f32 %v1071, %v1125
        %v1208 = vsub.f32 %v1073, %v1174
        %v1209 = vsub.f32 %v1075, %v1125
        %v1210 = vsub.f32 %v1077, %v1174
        %v1211 = vsub.f32 %v1081, %v1125
        %v1212 = vsub.f32 %v1083, %v1174
        %v1213 = vsub.f32 %v1085, %v1125
        %v1214 = vsub.f32 %v1087, %v1174
        %v1215 = vsub.f32 %v1091, %v1125
        %v1216 = vsub.f32 %v1093, %v1174
        %v1217 = vsub.f32 %v1095, %v1125
        %v1218 = vsub.f32 %v1097, %v1174
        %v1219 = vmul.f32 %v1175, 1.442695
        %v1220 = vpow.pop %v1219
        %v1221 = vmul.f32 %v1176, 1.442695
        %v1222 = vpow.pop %v1221
        %v1223 = vmul.f32 %v1177, 1.442695
        %v1224 = vpow.pop %v1223
        %v1225 = vmul.f32 %v1178, 1.442695
        %v1226 = vpow.pop %v1225
        %v1227 = vmul.f32 %v1179, 1.442695
        %v1228 = vpow.pop %v1227
        %v1229 = vmul.f32 %v1180, 1.442695
        %v1230 = vpow.pop %v1229
        %v1231 = vmul.f32 %v1181, 1.442695
        %v1232 = vpow.pop %v1231
        %v1233 = vmul.f32 %v1182, 1.442695
        %v1234 = vpow.pop %v1233
        %v1235 = vmul.f32 %v1183, 1.442695
        %v1236 = vpow.pop %v1235
        %v1237 = vmul.f32 %v1184, 1.442695
        %v1238 = vpow.pop %v1237
        %v1239 = vmul.f32 %v1185, 1.442695
        %v1240 = vpow.pop %v1239
        %v1241 = vmul.f32 %v1186, 1.442695
        %v1242 = vpow.pop %v1241
        %v1243 = vmul.f32 %v1187, 1.442695
        %v1244 = vpow.pop %v1243
        %v1245 = vmul.f32 %v1188, 1.442695
        %v1246 = vpow.pop %v1245
        %v1247 = vmul.f32 %v1189, 1.442695
        %v1248 = vpow.pop %v1247
        %v1249 = vmul.f32 %v1190, 1.442695
        %v1250 = vpow.pop %v1249
        %v1251 = vmul.f32 %v1191, 1.442695
        %v1252 = vpow.pop %v1251
        %v1253 = vmul.f32 %v1192, 1.442695
        %v1254 = vpow.pop %v1253
        %v1255 = vmul.f32 %v1193, 1.442695
        %v1256 = vpow.pop %v1255
        %v1257 = vmul.f32 %v1194, 1.442695
        %v1258 = vpow.pop %v1257
        %v1259 = vmul.f32 %v1195, 1.442695
        %v1260 = vpow.pop %v1259
        %v1261 = vmul.f32 %v1196, 1.442695
        %v1262 = vpow.pop %v1261
        %v1263 = vmul.f32 %v1197, 1.442695
        %v1264 = vpow.pop %v1263
        %v1265 = vmul.f32 %v1198, 1.442695
        %v1266 = vpow.pop %v1265
        %v1267 = vmul.f32 %v1199, 1.442695
        %v1268 = vpow.pop %v1267
        %v1269 = vmul.f32 %v1200, 1.442695
        %v1270 = vpow.pop %v1269
        %v1271 = vmul.f32 %v1201, 1.442695
        %v1272 = vpow.pop %v1271
        %v1273 = vmul.f32 %v1202, 1.442695
        %v1274 = vpow.pop %v1273
        %v1275 = vmul.f32 %v1203, 1.442695
        %v1276 = vpow.pop %v1275
        %v1277 = vmul.f32 %v1204, 1.442695
        %v1278 = vpow.pop %v1277
        %v1279 = vmul.f32 %v1205, 1.442695
        %v1280 = vpow.pop %v1279
        %v1281 = vmul.f32 %v1206, 1.442695
        %v1282 = vpow.pop %v1281
        %v1283 = vmul.f32 %v1207, 1.442695
        %v1284 = vpow.pop %v1283
        %v1285 = vmul.f32 %v1208, 1.442695
        %v1286 = vpow.pop %v1285
        %v1287 = vmul.f32 %v1209, 1.442695
        %v1288 = vpow.pop %v1287
        %v1289 = vmul.f32 %v1210, 1.442695
        %v1290 = vpow.pop %v1289
        %v1291 = vmul.f32 %v1211, 1.442695
        %v1292 = vpow.pop %v1291
        %v1293 = vmul.f32 %v1212, 1.442695
        %v1294 = vpow.pop %v1293
        %v1295 = vmul.f32 %v1213, 1.442695
        %v1296 = vpow.pop %v1295
        %v1297 = vmul.f32 %v1214, 1.442695
        %v1298 = vpow.pop %v1297
        %v1299 = vmul.f32 %v1215, 1.442695
        %v1300 = vpow.pop %v1299
        %v1301 = vmul.f32 %v1216, 1.442695
        %v1302 = vpow.pop %v1301
        %v1303 = vmul.f32 %v1217, 1.442695
        %v1304 = vpow.pop %v1303
        %v1305 = vmul.f32 %v1218, 1.442695
        %v1306 = vpow.pop %v1305
        %v1307 = vadd.f32 %v1220, %v1224
        %v1308 = vadd.f32 %v1307, %v1228
        %v1309 = vadd.f32 %v1308, %v1232
        %v1310 = vadd.f32 %v1309, %v1236
        %v1311 = vadd.f32 %v1310, %v1240
        %v1312 = vadd.f32 %v1311, %v1244
        %v1313 = vadd.f32 %v1312, %v1248
        %v1314 = vadd.f32 %v1313, %v1252
        %v1315 = vadd.f32 %v1314, %v1256
        %v1316 = vadd.f32 %v1315, %v1260
        %v1317 = vadd.f32 %v1316, %v1264
        %v1318 = vadd.f32 %v1317, %v1268
        %v1319 = vadd.f32 %v1318, %v1272
        %v1320 = vadd.f32 %v1319, %v1276
        %v1321 = vadd.f32 %v1320, %v1280
        %v1322 = vadd.f32 %v1321, %v1284
        %v1323 = vadd.f32 %v1322, %v1288
        %v1324 = vadd.f32 %v1323, %v1292
        %v1325 = vadd.f32 %v1324, %v1296
        %v1326 = vadd.f32 %v1325, %v1300
        %v1327 = vadd.f32 %v1326, %v1304
        %v1328 = vrot.slane %v1327, 4
        %v1329 = vadd.f32 %v1327, %v1328
        %v1330 = vrot.slane %v1329, 2
        %v1331 = vadd.f32 %v1329, %v1330
        %v1332 = vrot.slane %v1331, 1
        %v1333 = vadd.f32 %v1331, %v1332
        %v1334 = vsel %vm549, %v1222, 0.0
        %v1335 = vsel %vm549, %v1226, 0.0
        %v1336 = vadd.f32 %v1334, %v1335
        %v1337 = vsel %vm549, %v1230, 0.0
        %v1338 = vadd.f32 %v1336, %v1337
        %v1339 = vsel %vm549, %v1234, 0.0
        %v1340 = vadd.f32 %v1338, %v1339
        %v1341 = vsel %vm549, %v1238, 0.0
        %v1342 = vadd.f32 %v1340, %v1341
        %v1343 = vsel %vm549, %v1242, 0.0
        %v1344 = vadd.f32 %v1342, %v1343
        %v1345 = vsel %vm549, %v1246, 0.0
        %v1346 = vadd.f32 %v1344, %v1345
        %v1347 = vsel %vm549, %v1250, 0.0
        %v1348 = vadd.f32 %v1346, %v1347
        %v1349 = vsel %vm549, %v1254, 0.0
        %v1350 = vadd.f32 %v1348, %v1349
        %v1351 = vsel %vm549, %v1258, 0.0
        %v1352 = vadd.f32 %v1350, %v1351
        %v1353 = vsel %vm549, %v1262, 0.0
        %v1354 = vadd.f32 %v1352, %v1353
        %v1355 = vsel %vm549, %v1266, 0.0
        %v1356 = vadd.f32 %v1354, %v1355
        %v1357 = vsel %vm549, %v1270, 0.0
        %v1358 = vadd.f32 %v1356, %v1357
        %v1359 = vsel %vm549, %v1274, 0.0
        %v1360 = vadd.f32 %v1358, %v1359
        %v1361 = vsel %vm549, %v1278, 0.0
        %v1362 = vadd.f32 %v1360, %v1361
        %v1363 = vsel %vm549, %v1282, 0.0
        %v1364 = vadd.f32 %v1362, %v1363
        %v1365 = vsel %vm549, %v1286, 0.0
        %v1366 = vadd.f32 %v1364, %v1365
        %v1367 = vsel %vm549, %v1290, 0.0
        %v1368 = vadd.f32 %v1366, %v1367
        %v1369 = vsel %vm549, %v1294, 0.0
        %v1370 = vadd.f32 %v1368, %v1369
        %v1371 = vsel %vm549, %v1298, 0.0
        %v1372 = vadd.f32 %v1370, %v1371
        %v1373 = vsel %vm549, %v1302, 0.0
        %v1374 = vadd.f32 %v1372, %v1373
        %v1375 = vsel %vm549, %v1306, 0.0
        %v1376 = vadd.f32 %v1374, %v1375
        %v1377 = vrot.slane %v1376, 4
        %v1378 = vadd.f32 %v1376, %v1377
        %v1379 = vrot.slane %v1378, 2
        %v1380 = vadd.f32 %v1378, %v1379
        %v1381 = vrot.slane %v1380, 1
        %v1382 = vadd.f32 %v1380, %v1381
        %v1383 = vrcp.pop %v1333
        %v1384 = vmul.f32 1.0, %v1383
        %v1385 = vrcp.pop %v1382
        %v1386 = vmul.f32 1.0, %v1385
        %v1387 = vpack.c.bf16 %v1224, %v1220
        %v1388 = vpack.c.bf16 %v1226, %v1222
        %v1389 = vpack.c.bf16 %v1232, %v1228
        %v1390 = vpack.c.bf16 %v1234, %v1230
        %v1391 = vpack.c.bf16 %v1240, %v1236
        %v1392 = vpack.c.bf16 %v1242, %v1238
        %v1393 = vpack.c.bf16 %v1248, %v1244
        %v1394 = vpack.c.bf16 %v1250, %v1246
        %v1395 = vpack.c.bf16 %v1256, %v1252
        %v1396 = vpack.c.bf16 %v1258, %v1254
        %v1397 = vpack.c.bf16 %v1264, %v1260
        %v1398 = vpack.c.bf16 %v1266, %v1262
        %v1399 = vpack.c.bf16 %v1272, %v1268
        %v1400 = vpack.c.bf16 %v1274, %v1270
        %v1401 = vpack.c.bf16 %v1280, %v1276
        %v1402 = vpack.c.bf16 %v1282, %v1278
        %v1403 = vpack.c.bf16 %v1288, %v1284
        %v1404 = vpack.c.bf16 %v1290, %v1286
        %v1405 = vpack.c.bf16 %v1296, %v1292
        %v1406 = vpack.c.bf16 %v1298, %v1294
        %v1407 = vpack.c.bf16 %v1304, %v1300
        %v1408 = vpack.c.bf16 %v1306, %v1302
        %v1410 = vsel %vm549, %v880, 0
        %1412 = vmatprep.subr.bf16.mxu0 %v1388
        %1413 = vmatpush1.bf16.msra.mxu0 %v1387
        %1414 = vmatprep.subr.bf16.mxu0 %v1390
        %1415 = vmatpush1.bf16.msra.mxu0 %v1389
        %1416 = vmatprep.subr.bf16.mxu0 %v1392
        %1417 = vmatpush1.bf16.msra.mxu0 %v1391
        %1418 = vmatprep.subr.bf16.mxu0 %v1394
        %1419 = vmatpush1.bf16.msra.mxu0 %v1393
        %1420 = vmatprep.subr.bf16.mxu0 %v1396
        %1421 = vmatpush1.bf16.msra.mxu0 %v1395
        %1422 = vmatprep.subr.bf16.mxu0 %v1398
        %1423 = vmatpush1.bf16.msra.mxu0 %v1397
        %1424 = vmatprep.subr.bf16.mxu0 %v1400
        %1425 = vmatpush1.bf16.msra.mxu0 %v1399
        %1426 = vmatprep.subr.bf16.mxu0 %v1402
        %1427 = vmatpush1.bf16.msra.mxu0 %v1401
        %1428 = vmatprep.subr.bf16.mxu0 %v1404
        %1429 = vmatpush1.bf16.msra.mxu0 %v1403
        %1430 = vmatprep.subr.bf16.mxu0 %v1406
        %1431 = vmatpush1.bf16.msra.mxu0 %v1405
        %1432 = vmatprep.subr.bf16.mxu0 %v1408
        %1433 = vmatpush1.bf16.msra.mxu0 %v1407
        %1434 = vmatprep.subr.bf16.mxu0 0
        %1435 = vmatpush1.bf16.msra.mxu0 0
        %1436 = vmatprep.subr.bf16.mxu0 0
        %1437 = vmatpush1.bf16.msra.mxu0 0
        %1438 = vmatprep.subr.bf16.mxu0 0
        %1439 = vmatpush1.bf16.msra.mxu0 0
        %1440 = vmatprep.subr.bf16.mxu0 0
        %1441 = vmatpush1.bf16.msra.mxu0 0
        %1442 = vmatprep.subr.bf16.mxu0 0
        %1443 = vmatpush1.bf16.msra.mxu0 0
        %1444 = vmatprep.mubr.bf16.mxu0 %v1410
        %1445 = vmatmul.mubr.bf16.gmra.mrb[0].mxu0 %v879
        %v1446 = vpop.f32.mrb[0].mxu0
        %v1447 = vadd.f32 0.0, %v1446
        %v1448 = vpop.f32.mrb[0].mxu0
        %v1449 = vadd.f32 0.0, %v1448
        %v1450 = vpop.f32.mrb[0].mxu0
        %v1451 = vpop.f32.mrb[0].mxu0
        %1452 = vdwg.mxu0
        %v1453 = vmul.f32 %v1447, %v1384
        %v1454 = vmul.f32 %v1449, %v1386
        %v1455 = vpack.c.bf16 %v288, %v288
        %v1456 = vpack.c.bf16 %v289, %v289
        %v1457 = vmul.f32 %v288, 0.35355338
        %v1458 = vmul.f32 %v289, 0.35355338
        %v1459 = vpack.c.bf16 %v1457, %v1457
        %v1460 = vpack.c.bf16 %v1458, %v1458
        %1461 = vxpose.xlu0.c.b16.start [1/8] %v1455, 128
        %1462 = vxpose.xlu0.c.b16.cont [2/8] 0, 128
        %1463 = vxpose.xlu0.c.b16.cont [3/8] 0, 128
        %1464 = vxpose.xlu0.c.b16.cont [4/8] 0, 128
        %1465 = vxpose.xlu0.c.b16.cont [5/8] 0, 128
        %1466 = vxpose.xlu0.c.b16.cont [6/8] 0, 128
        %1467 = vxpose.xlu0.c.b16.cont [7/8] 0, 128
        %1468 = vxpose.xlu0.c.b16.end [8/8] 0, 128
        %v1469 = vpop.trf.xlu0
        %v1470 = vpop.trf.xlu0
        %v1471 = vpop.trf.xlu0
        %v1472 = vpop.trf.xlu0
        %v1473 = vpop.trf.xlu0
        %v1474 = vpop.trf.xlu0
        %v1475 = vpop.trf.xlu0
        %v1476 = vpop.trf.xlu0
        %1477 = vxpose.xlu0.c.b16.start [1/8] %v1456, 128
        %1478 = vxpose.xlu0.c.b16.cont [2/8] 0, 128
        %1479 = vxpose.xlu0.c.b16.cont [3/8] 0, 128
        %1480 = vxpose.xlu0.c.b16.cont [4/8] 0, 128
        %1481 = vxpose.xlu0.c.b16.cont [5/8] 0, 128
        %1482 = vxpose.xlu0.c.b16.cont [6/8] 0, 128
        %1483 = vxpose.xlu0.c.b16.cont [7/8] 0, 128
        %1484 = vxpose.xlu0.c.b16.end [8/8] 0, 128
        %v1485 = vpop.trf.xlu0
        %v1486 = vpop.trf.xlu0
        %v1487 = vpop.trf.xlu0
        %v1488 = vpop.trf.xlu0
        %v1489 = vpop.trf.xlu0
        %v1490 = vpop.trf.xlu0
        %v1491 = vpop.trf.xlu0
        %v1492 = vpop.trf.xlu0
        %v1494 = vsel %vm338, %v1469, 0
        %v1497 = vsel %vm338, %v1470, 0
        %v1500 = vsel %vm338, %v1471, 0
        %v1503 = vsel %vm338, %v1472, 0
        %v1506 = vsel %vm338, %v1473, 0
        %v1509 = vsel %vm338, %v1474, 0
        %v1512 = vsel %vm338, %v1475, 0
        %v1515 = vsel %vm338, %v1476, 0
        %v1518 = vsel %vm338, %v1485, 0
        %v1521 = vsel %vm338, %v1486, 0
        %v1524 = vsel %vm338, %v1487, 0
        %v1527 = vsel %vm372, %v1459, 0
        %v1530 = vsel %vm372, %v1460, 0
        %1532 = vmatprep.subr.bf16.mxu0 %v1530
        %1533 = vmatpush1.bf16.msra.mxu0 %v1527
        %1534 = vmatprep.subr.bf16.mxu0 0
        %1535 = vmatpush1.bf16.msra.mxu0 0
        %1536 = vmatprep.subr.bf16.mxu0 0
        %1537 = vmatpush1.bf16.msra.mxu0 0
        %1538 = vmatprep.subr.bf16.mxu0 0
        %1539 = vmatpush1.bf16.msra.mxu0 0
        %1540 = vmatprep.subr.bf16.mxu0 0
        %1541 = vmatpush1.bf16.msra.mxu0 0
        %1542 = vmatprep.subr.bf16.mxu0 0
        %1543 = vmatpush1.bf16.msra.mxu0 0
        %1544 = vmatprep.subr.bf16.mxu0 0
        %1545 = vmatpush1.bf16.msra.mxu0 0
        %1546 = vmatprep.subr.bf16.mxu0 0
        %1547 = vmatpush1.bf16.msra.mxu0 0
        %1548 = vmatprep.subr.bf16.mxu0 0
        %1549 = vmatpush1.bf16.msra.mxu0 0
        %1550 = vmatprep.subr.bf16.mxu0 0
        %1551 = vmatpush1.bf16.msra.mxu0 0
        %1552 = vmatprep.subr.bf16.mxu0 0
        %1553 = vmatpush1.bf16.msra.mxu0 0
        %1554 = vmatprep.subr.bf16.mxu0 0
        %1555 = vmatpush1.bf16.msra.mxu0 0
        %1556 = vmatprep.subr.bf16.mxu0 0
        %1557 = vmatpush1.bf16.msra.mxu0 0
        %1558 = vmatprep.subr.bf16.mxu0 0
        %1559 = vmatpush1.bf16.msra.mxu0 0
        %1560 = vmatprep.subr.bf16.mxu0 0
        %1561 = vmatpush1.bf16.msra.mxu0 0
        %1562 = vmatprep.subr.bf16.mxu0 0
        %1563 = vmatpush1.bf16.msra.mxu0 0
        %1564 = vmatprep.mubr.bf16.mxu0 0
        %1565 = vmatmul.mubr.bf16.gmra.mrb[0].mxu0 %v1494
        %v1566 = vpop.f32.mrb[0].mxu0
        %v1567 = vadd.f32 0.0, %v1566
        %v1568 = vpop.f32.mrb[0].mxu0
        %v1569 = vadd.f32 0.0, %v1568
        %v1570 = vpop.f32.mrb[0].mxu0
        %v1571 = vadd.f32 0.0, %v1570
        %v1572 = vpop.f32.mrb[0].mxu0
        %v1573 = vadd.f32 0.0, %v1572
        %1574 = vmatprep.mubr.bf16.mxu0 0
        %1575 = vmatmul.mubr.bf16.gmra.mrb[0].mxu0 %v1497
        %v1576 = vpop.f32.mrb[0].mxu0
        %v1577 = vadd.f32 0.0, %v1576
        %v1578 = vpop.f32.mrb[0].mxu0
        %v1579 = vadd.f32 0.0, %v1578
        %v1580 = vpop.f32.mrb[0].mxu0
        %v1581 = vadd.f32 0.0, %v1580
        %v1582 = vpop.f32.mrb[0].mxu0
        %v1583 = vadd.f32 0.0, %v1582
        %1584 = vmatprep.mubr.bf16.mxu0 0
        %1585 = vmatmul.mubr.bf16.gmra.mrb[0].mxu0 %v1500
        %v1586 = vpop.f32.mrb[0].mxu0
        %v1587 = vadd.f32 0.0, %v1586
        %v1588 = vpop.f32.mrb[0].mxu0
        %v1589 = vadd.f32 0.0, %v1588
        %v1590 = vpop.f32.mrb[0].mxu0
        %v1591 = vadd.f32 0.0, %v1590
        %v1592 = vpop.f32.mrb[0].mxu0
        %v1593 = vadd.f32 0.0, %v1592
        %1594 = vmatprep.mubr.bf16.mxu0 0
        %1595 = vmatmul.mubr.bf16.gmra.mrb[0].mxu0 %v1503
        %v1596 = vpop.f32.mrb[0].mxu0
        %v1597 = vadd.f32 0.0, %v1596
        %v1598 = vpop.f32.mrb[0].mxu0
        %v1599 = vadd.f32 0.0, %v1598
        %v1600 = vpop.f32.mrb[0].mxu0
        %v1601 = vadd.f32 0.0, %v1600
        %v1602 = vpop.f32.mrb[0].mxu0
        %v1603 = vadd.f32 0.0, %v1602
        %1604 = vmatprep.mubr.bf16.mxu0 0
        %1605 = vmatmul.mubr.bf16.gmra.mrb[0].mxu0 %v1506
        %v1606 = vpop.f32.mrb[0].mxu0
        %v1607 = vadd.f32 0.0, %v1606
        %v1608 = vpop.f32.mrb[0].mxu0
        %v1609 = vadd.f32 0.0, %v1608
        %v1610 = vpop.f32.mrb[0].mxu0
        %v1611 = vadd.f32 0.0, %v1610
        %v1612 = vpop.f32.mrb[0].mxu0
        %v1613 = vadd.f32 0.0, %v1612
        %1614 = vmatprep.mubr.bf16.mxu0 0
        %1615 = vmatmul.mubr.bf16.gmra.mrb[0].mxu0 %v1509
        %v1616 = vpop.f32.mrb[0].mxu0
        %v1617 = vadd.f32 0.0, %v1616
        %v1618 = vpop.f32.mrb[0].mxu0
        %v1619 = vadd.f32 0.0, %v1618
        %v1620 = vpop.f32.mrb[0].mxu0
        %v1621 = vadd.f32 0.0, %v1620
        %v1622 = vpop.f32.mrb[0].mxu0
        %v1623 = vadd.f32 0.0, %v1622
        %1624 = vmatprep.mubr.bf16.mxu0 0
        %1625 = vmatmul.mubr.bf16.gmra.mrb[0].mxu0 %v1512
        %v1626 = vpop.f32.mrb[0].mxu0
        %v1627 = vadd.f32 0.0, %v1626
        %v1628 = vpop.f32.mrb[0].mxu0
        %v1629 = vadd.f32 0.0, %v1628
        %v1630 = vpop.f32.mrb[0].mxu0
        %v1631 = vadd.f32 0.0, %v1630
        %v1632 = vpop.f32.mrb[0].mxu0
        %v1633 = vadd.f32 0.0, %v1632
        %1634 = vmatprep.mubr.bf16.mxu0 0
        %1635 = vmatmul.mubr.bf16.gmra.mrb[0].mxu0 %v1515
        %v1636 = vpop.f32.mrb[0].mxu0
        %v1637 = vadd.f32 0.0, %v1636
        %v1638 = vpop.f32.mrb[0].mxu0
        %v1639 = vadd.f32 0.0, %v1638
        %v1640 = vpop.f32.mrb[0].mxu0
        %v1641 = vadd.f32 0.0, %v1640
        %v1642 = vpop.f32.mrb[0].mxu0
        %v1643 = vadd.f32 0.0, %v1642
        %1644 = vmatprep.mubr.bf16.mxu0 0
        %1645 = vmatmul.mubr.bf16.gmra.mrb[0].mxu0 %v1518
        %v1646 = vpop.f32.mrb[0].mxu0
        %v1647 = vadd.f32 0.0, %v1646
        %v1648 = vpop.f32.mrb[0].mxu0
        %v1649 = vadd.f32 0.0, %v1648
        %v1650 = vpop.f32.mrb[0].mxu0
        %v1651 = vadd.f32 0.0, %v1650
        %v1652 = vpop.f32.mrb[0].mxu0
        %v1653 = vadd.f32 0.0, %v1652
        %1654 = vmatprep.mubr.bf16.mxu0 0
        %1655 = vmatmul.mubr.bf16.gmra.mrb[0].mxu0 %v1521
        %v1656 = vpop.f32.mrb[0].mxu0
        %v1657 = vadd.f32 0.0, %v1656
        %v1658 = vpop.f32.mrb[0].mxu0
        %v1659 = vadd.f32 0.0, %v1658
        %v1660 = vpop.f32.mrb[0].mxu0
        %v1661 = vadd.f32 0.0, %v1660
        %v1662 = vpop.f32.mrb[0].mxu0
        %v1663 = vadd.f32 0.0, %v1662
        %1664 = vmatprep.mubr.bf16.mxu0 0
        %1665 = vmatmul.mubr.bf16.gmra.mrb[0].mxu0 %v1524
        %v1666 = vpop.f32.mrb[0].mxu0
        %v1667 = vadd.f32 0.0, %v1666
        %v1668 = vpop.f32.mrb[0].mxu0
        %v1669 = vadd.f32 0.0, %v1668
        %v1670 = vpop.f32.mrb[0].mxu0
        %v1671 = vadd.f32 0.0, %v1670
        %v1672 = vpop.f32.mrb[0].mxu0
        %v1673 = vadd.f32 0.0, %v1672
        %1674 = vdwg.mxu0
        %v1675 = vmax.f32 %v1567, %v1577
        %v1676 = vmax.f32 %v1571, %v1581
        %v1677 = vmax.f32 %v1675, %v1587
        %v1678 = vmax.f32 %v1676, %v1591
        %v1679 = vmax.f32 %v1677, %v1597
        %v1680 = vmax.f32 %v1678, %v1601
        %v1681 = vmax.f32 %v1679, %v1607
        %v1682 = vmax.f32 %v1680, %v1611
        %v1683 = vmax.f32 %v1681, %v1617
        %v1684 = vmax.f32 %v1682, %v1621
        %v1685 = vmax.f32 %v1683, %v1627
        %v1686 = vmax.f32 %v1684, %v1631
        %v1687 = vmax.f32 %v1685, %v1637
        %v1688 = vmax.f32 %v1686, %v1641
        %v1689 = vmax.f32 %v1687, %v1647
        %v1690 = vmax.f32 %v1688, %v1651
        %v1691 = vmax.f32 %v1689, %v1657
        %v1692 = vmax.f32 %v1690, %v1661
        %v1693 = vmax.f32 %v1691, %v1667
        %v1694 = vmax.f32 %v1692, %v1671
        %v1695 = vmax.f32 %v1693, %v1694
        %v1696 = vrot.slane %v1695, 4
        %v1697 = vmax.f32 %v1695, %v1696
        %v1698 = vrot.slane %v1697, 2
        %v1699 = vmax.f32 %v1697, %v1698
        %v1700 = vrot.slane %v1699, 1
        %v1701 = vmax.f32 %v1699, %v1700
        %v1702 = vsel %vm549, %v1569, -inf
        %v1703 = vsel %vm549, %v1573, -inf
        %v1704 = vsel %vm549, %v1579, -inf
        %v1705 = vmax.f32 %v1702, %v1704
        %v1706 = vsel %vm549, %v1583, -inf
        %v1707 = vmax.f32 %v1703, %v1706
        %v1708 = vsel %vm549, %v1589, -inf
        %v1709 = vmax.f32 %v1705, %v1708
        %v1710 = vsel %vm549, %v1593, -inf
        %v1711 = vmax.f32 %v1707, %v1710
        %v1712 = vsel %vm549, %v1599, -inf
        %v1713 = vmax.f32 %v1709, %v1712
        %v1714 = vsel %vm549, %v1603, -inf
        %v1715 = vmax.f32 %v1711, %v1714
        %v1716 = vsel %vm549, %v1609, -inf
        %v1717 = vmax.f32 %v1713, %v1716
        %v1718 = vsel %vm549, %v1613, -inf
        %v1719 = vmax.f32 %v1715, %v1718
        %v1720 = vsel %vm549, %v1619, -inf
        %v1721 = vmax.f32 %v1717, %v1720
        %v1722 = vsel %vm549, %v1623, -inf
        %v1723 = vmax.f32 %v1719, %v1722
        %v1724 = vsel %vm549, %v1629, -inf
        %v1725 = vmax.f32 %v1721, %v1724
        %v1726 = vsel %vm549, %v1633, -inf
        %v1727 = vmax.f32 %v1723, %v1726
        %v1728 = vsel %vm549, %v1639, -inf
        %v1729 = vmax.f32 %v1725, %v1728
        %v1730 = vsel %vm549, %v1643, -inf
        %v1731 = vmax.f32 %v1727, %v1730
        %v1732 = vsel %vm549, %v1649, -inf
        %v1733 = vmax.f32 %v1729, %v1732
        %v1734 = vsel %vm549, %v1653, -inf
        %v1735 = vmax.f32 %v1731, %v1734
        %v1736 = vsel %vm549, %v1659, -inf
        %v1737 = vmax.f32 %v1733, %v1736
        %v1738 = vsel %vm549, %v1663, -inf
        %v1739 = vmax.f32 %v1735, %v1738
        %v1740 = vsel %vm549, %v1669, -inf
        %v1741 = vmax.f32 %v1737, %v1740
        %v1742 = vsel %vm549, %v1673, -inf
        %v1743 = vmax.f32 %v1739, %v1742
        %v1744 = vmax.f32 %v1741, %v1743
        %v1745 = vrot.slane %v1744, 4
        %v1746 = vmax.f32 %v1744, %v1745
        %v1747 = vrot.slane %v1746, 2
        %v1748 = vmax.f32 %v1746, %v1747
        %v1749 = vrot.slane %v1748, 1
        %v1750 = vmax.f32 %v1748, %v1749
        %v1751 = vsub.f32 %v1567, %v1701
        %v1752 = vsub.f32 %v1569, %v1750
        %v1753 = vsub.f32 %v1571, %v1701
        %v1754 = vsub.f32 %v1573, %v1750
        %v1755 = vsub.f32 %v1577, %v1701
        %v1756 = vsub.f32 %v1579, %v1750
        %v1757 = vsub.f32 %v1581, %v1701
        %v1758 = vsub.f32 %v1583, %v1750
        %v1759 = vsub.f32 %v1587, %v1701
        %v1760 = vsub.f32 %v1589, %v1750
        %v1761 = vsub.f32 %v1591, %v1701
        %v1762 = vsub.f32 %v1593, %v1750
        %v1763 = vsub.f32 %v1597, %v1701
        %v1764 = vsub.f32 %v1599, %v1750
        %v1765 = vsub.f32 %v1601, %v1701
        %v1766 = vsub.f32 %v1603, %v1750
        %v1767 = vsub.f32 %v1607, %v1701
        %v1768 = vsub.f32 %v1609, %v1750
        %v1769 = vsub.f32 %v1611, %v1701
        %v1770 = vsub.f32 %v1613, %v1750
        %v1771 = vsub.f32 %v1617, %v1701
        %v1772 = vsub.f32 %v1619, %v1750
        %v1773 = vsub.f32 %v1621, %v1701
        %v1774 = vsub.f32 %v1623, %v1750
        %v1775 = vsub.f32 %v1627, %v1701
        %v1776 = vsub.f32 %v1629, %v1750
        %v1777 = vsub.f32 %v1631, %v1701
        %v1778 = vsub.f32 %v1633, %v1750
        %v1779 = vsub.f32 %v1637, %v1701
        %v1780 = vsub.f32 %v1639, %v1750
        %v1781 = vsub.f32 %v1641, %v1701
        %v1782 = vsub.f32 %v1643, %v1750
        %v1783 = vsub.f32 %v1647, %v1701
        %v1784 = vsub.f32 %v1649, %v1750
        %v1785 = vsub.f32 %v1651, %v1701
        %v1786 = vsub.f32 %v1653, %v1750
        %v1787 = vsub.f32 %v1657, %v1701
        %v1788 = vsub.f32 %v1659, %v1750
        %v1789 = vsub.f32 %v1661, %v1701
        %v1790 = vsub.f32 %v1663, %v1750
        %v1791 = vsub.f32 %v1667, %v1701
        %v1792 = vsub.f32 %v1669, %v1750
        %v1793 = vsub.f32 %v1671, %v1701
        %v1794 = vsub.f32 %v1673, %v1750
        %v1795 = vmul.f32 %v1751, 1.442695
        %v1796 = vpow.pop %v1795
        %v1797 = vmul.f32 %v1752, 1.442695
        %v1798 = vpow.pop %v1797
        %v1799 = vmul.f32 %v1753, 1.442695
        %v1800 = vpow.pop %v1799
        %v1801 = vmul.f32 %v1754, 1.442695
        %v1802 = vpow.pop %v1801
        %v1803 = vmul.f32 %v1755, 1.442695
        %v1804 = vpow.pop %v1803
        %v1805 = vmul.f32 %v1756, 1.442695
        %v1806 = vpow.pop %v1805
        %v1807 = vmul.f32 %v1757, 1.442695
        %v1808 = vpow.pop %v1807
        %v1809 = vmul.f32 %v1758, 1.442695
        %v1810 = vpow.pop %v1809
        %v1811 = vmul.f32 %v1759, 1.442695
        %v1812 = vpow.pop %v1811
        %v1813 = vmul.f32 %v1760, 1.442695
        %v1814 = vpow.pop %v1813
        %v1815 = vmul.f32 %v1761, 1.442695
        %v1816 = vpow.pop %v1815
        %v1817 = vmul.f32 %v1762, 1.442695
        %v1818 = vpow.pop %v1817
        %v1819 = vmul.f32 %v1763, 1.442695
        %v1820 = vpow.pop %v1819
        %v1821 = vmul.f32 %v1764, 1.442695
        %v1822 = vpow.pop %v1821
        %v1823 = vmul.f32 %v1765, 1.442695
        %v1824 = vpow.pop %v1823
        %v1825 = vmul.f32 %v1766, 1.442695
        %v1826 = vpow.pop %v1825
        %v1827 = vmul.f32 %v1767, 1.442695
        %v1828 = vpow.pop %v1827
        %v1829 = vmul.f32 %v1768, 1.442695
        %v1830 = vpow.pop %v1829
        %v1831 = vmul.f32 %v1769, 1.442695
        %v1832 = vpow.pop %v1831
        %v1833 = vmul.f32 %v1770, 1.442695
        %v1834 = vpow.pop %v1833
        %v1835 = vmul.f32 %v1771, 1.442695
        %v1836 = vpow.pop %v1835
        %v1837 = vmul.f32 %v1772, 1.442695
        %v1838 = vpow.pop %v1837
        %v1839 = vmul.f32 %v1773, 1.442695
        %v1840 = vpow.pop %v1839
        %v1841 = vmul.f32 %v1774, 1.442695
        %v1842 = vpow.pop %v1841
        %v1843 = vmul.f32 %v1775, 1.442695
        %v1844 = vpow.pop %v1843
        %v1845 = vmul.f32 %v1776, 1.442695
        %v1846 = vpow.pop %v1845
        %v1847 = vmul.f32 %v1777, 1.442695
        %v1848 = vpow.pop %v1847
        %v1849 = vmul.f32 %v1778, 1.442695
        %v1850 = vpow.pop %v1849
        %v1851 = vmul.f32 %v1779, 1.442695
        %v1852 = vpow.pop %v1851
        %v1853 = vmul.f32 %v1780, 1.442695
        %v1854 = vpow.pop %v1853
        %v1855 = vmul.f32 %v1781, 1.442695
        %v1856 = vpow.pop %v1855
        %v1857 = vmul.f32 %v1782, 1.442695
        %v1858 = vpow.pop %v1857
        %v1859 = vmul.f32 %v1783, 1.442695
        %v1860 = vpow.pop %v1859
        %v1861 = vmul.f32 %v1784, 1.442695
        %v1862 = vpow.pop %v1861
        %v1863 = vmul.f32 %v1785, 1.442695
        %v1864 = vpow.pop %v1863
        %v1865 = vmul.f32 %v1786, 1.442695
        %v1866 = vpow.pop %v1865
        %v1867 = vmul.f32 %v1787, 1.442695
        %v1868 = vpow.pop %v1867
        %v1869 = vmul.f32 %v1788, 1.442695
        %v1870 = vpow.pop %v1869
        %v1871 = vmul.f32 %v1789, 1.442695
        %v1872 = vpow.pop %v1871
        %v1873 = vmul.f32 %v1790, 1.442695
        %v1874 = vpow.pop %v1873
        %v1875 = vmul.f32 %v1791, 1.442695
        %v1876 = vpow.pop %v1875
        %v1877 = vmul.f32 %v1792, 1.442695
        %v1878 = vpow.pop %v1877
        %v1879 = vmul.f32 %v1793, 1.442695
        %v1880 = vpow.pop %v1879
        %v1881 = vmul.f32 %v1794, 1.442695
        %v1882 = vpow.pop %v1881
        %v1883 = vadd.f32 %v1796, %v1800
        %v1884 = vadd.f32 %v1883, %v1804
        %v1885 = vadd.f32 %v1884, %v1808
        %v1886 = vadd.f32 %v1885, %v1812
        %v1887 = vadd.f32 %v1886, %v1816
        %v1888 = vadd.f32 %v1887, %v1820
        %v1889 = vadd.f32 %v1888, %v1824
        %v1890 = vadd.f32 %v1889, %v1828
        %v1891 = vadd.f32 %v1890, %v1832
        %v1892 = vadd.f32 %v1891, %v1836
        %v1893 = vadd.f32 %v1892, %v1840
        %v1894 = vadd.f32 %v1893, %v1844
        %v1895 = vadd.f32 %v1894, %v1848
        %v1896 = vadd.f32 %v1895, %v1852
        %v1897 = vadd.f32 %v1896, %v1856
        %v1898 = vadd.f32 %v1897, %v1860
        %v1899 = vadd.f32 %v1898, %v1864
        %v1900 = vadd.f32 %v1899, %v1868
        %v1901 = vadd.f32 %v1900, %v1872
        %v1902 = vadd.f32 %v1901, %v1876
        %v1903 = vadd.f32 %v1902, %v1880
        %v1904 = vrot.slane %v1903, 4
        %v1905 = vadd.f32 %v1903, %v1904
        %v1906 = vrot.slane %v1905, 2
        %v1907 = vadd.f32 %v1905, %v1906
        %v1908 = vrot.slane %v1907, 1
        %v1909 = vadd.f32 %v1907, %v1908
        %v1910 = vsel %vm549, %v1798, 0.0
        %v1911 = vsel %vm549, %v1802, 0.0
        %v1912 = vadd.f32 %v1910, %v1911
        %v1913 = vsel %vm549, %v1806, 0.0
        %v1914 = vadd.f32 %v1912, %v1913
        %v1915 = vsel %vm549, %v1810, 0.0
        %v1916 = vadd.f32 %v1914, %v1915
        %v1917 = vsel %vm549, %v1814, 0.0
        %v1918 = vadd.f32 %v1916, %v1917
        %v1919 = vsel %vm549, %v1818, 0.0
        %v1920 = vadd.f32 %v1918, %v1919
        %v1921 = vsel %vm549, %v1822, 0.0
        %v1922 = vadd.f32 %v1920, %v1921
        %v1923 = vsel %vm549, %v1826, 0.0
        %v1924 = vadd.f32 %v1922, %v1923
        %v1925 = vsel %vm549, %v1830, 0.0
        %v1926 = vadd.f32 %v1924, %v1925
        %v1927 = vsel %vm549, %v1834, 0.0
        %v1928 = vadd.f32 %v1926, %v1927
        %v1929 = vsel %vm549, %v1838, 0.0
        %v1930 = vadd.f32 %v1928, %v1929
        %v1931 = vsel %vm549, %v1842, 0.0
        %v1932 = vadd.f32 %v1930, %v1931
        %v1933 = vsel %vm549, %v1846, 0.0
        %v1934 = vadd.f32 %v1932, %v1933
        %v1935 = vsel %vm549, %v1850, 0.0
        %v1936 = vadd.f32 %v1934, %v1935
        %v1937 = vsel %vm549, %v1854, 0.0
        %v1938 = vadd.f32 %v1936, %v1937
        %v1939 = vsel %vm549, %v1858, 0.0
        %v1940 = vadd.f32 %v1938, %v1939
        %v1941 = vsel %vm549, %v1862, 0.0
        %v1942 = vadd.f32 %v1940, %v1941
        %v1943 = vsel %vm549, %v1866, 0.0
        %v1944 = vadd.f32 %v1942, %v1943
        %v1945 = vsel %vm549, %v1870, 0.0
        %v1946 = vadd.f32 %v1944, %v1945
        %v1947 = vsel %vm549, %v1874, 0.0
        %v1948 = vadd.f32 %v1946, %v1947
        %v1949 = vsel %vm549, %v1878, 0.0
        %v1950 = vadd.f32 %v1948, %v1949
        %v1951 = vsel %vm549, %v1882, 0.0
        %v1952 = vadd.f32 %v1950, %v1951
        %v1953 = vrot.slane %v1952, 4
        %v1954 = vadd.f32 %v1952, %v1953
        %v1955 = vrot.slane %v1954, 2
        %v1956 = vadd.f32 %v1954, %v1955
        %v1957 = vrot.slane %v1956, 1
        %v1958 = vadd.f32 %v1956, %v1957
        %v1959 = vrcp.pop %v1909
        %v1960 = vmul.f32 1.0, %v1959
        %v1961 = vrcp.pop %v1958
        %v1962 = vmul.f32 1.0, %v1961
        %v1963 = vpack.c.bf16 %v1800, %v1796
        %v1964 = vpack.c.bf16 %v1802, %v1798
        %v1965 = vpack.c.bf16 %v1808, %v1804
        %v1966 = vpack.c.bf16 %v1810, %v1806
        %v1967 = vpack.c.bf16 %v1816, %v1812
        %v1968 = vpack.c.bf16 %v1818, %v1814
        %v1969 = vpack.c.bf16 %v1824, %v1820
        %v1970 = vpack.c.bf16 %v1826, %v1822
        %v1971 = vpack.c.bf16 %v1832, %v1828
        %v1972 = vpack.c.bf16 %v1834, %v1830
        %v1973 = vpack.c.bf16 %v1840, %v1836
        %v1974 = vpack.c.bf16 %v1842, %v1838
        %v1975 = vpack.c.bf16 %v1848, %v1844
        %v1976 = vpack.c.bf16 %v1850, %v1846
        %v1977 = vpack.c.bf16 %v1856, %v1852
        %v1978 = vpack.c.bf16 %v1858, %v1854
        %v1979 = vpack.c.bf16 %v1864, %v1860
        %v1980 = vpack.c.bf16 %v1866, %v1862
        %v1981 = vpack.c.bf16 %v1872, %v1868
        %v1982 = vpack.c.bf16 %v1874, %v1870
        %v1983 = vpack.c.bf16 %v1880, %v1876
        %v1984 = vpack.c.bf16 %v1882, %v1878
        %v1986 = vsel %vm549, %v1456, 0
        %1988 = vmatprep.subr.bf16.mxu0 %v1964
        %1989 = vmatpush1.bf16.msra.mxu0 %v1963
        %1990 = vmatprep.subr.bf16.mxu0 %v1966
        %1991 = vmatpush1.bf16.msra.mxu0 %v1965
        %1992 = vmatprep.subr.bf16.mxu0 %v1968
        %1993 = vmatpush1.bf16.msra.mxu0 %v1967
        %1994 = vmatprep.subr.bf16.mxu0 %v1970
        %1995 = vmatpush1.bf16.msra.mxu0 %v1969
        %1996 = vmatprep.subr.bf16.mxu0 %v1972
        %1997 = vmatpush1.bf16.msra.mxu0 %v1971
        %1998 = vmatprep.subr.bf16.mxu0 %v1974
        %1999 = vmatpush1.bf16.msra.mxu0 %v1973
        %2000 = vmatprep.subr.bf16.mxu0 %v1976
        %2001 = vmatpush1.bf16.msra.mxu0 %v1975
        %2002 = vmatprep.subr.bf16.mxu0 %v1978
        %2003 = vmatpush1.bf16.msra.mxu0 %v1977
        %2004 = vmatprep.subr.bf16.mxu0 %v1980
        %2005 = vmatpush1.bf16.msra.mxu0 %v1979
        %2006 = vmatprep.subr.bf16.mxu0 %v1982
        %2007 = vmatpush1.bf16.msra.mxu0 %v1981
        %2008 = vmatprep.subr.bf16.mxu0 %v1984
        %2009 = vmatpush1.bf16.msra.mxu0 %v1983
        %2010 = vmatprep.subr.bf16.mxu0 0
        %2011 = vmatpush1.bf16.msra.mxu0 0
        %2012 = vmatprep.subr.bf16.mxu0 0
        %2013 = vmatpush1.bf16.msra.mxu0 0
        %2014 = vmatprep.subr.bf16.mxu0 0
        %2015 = vmatpush1.bf16.msra.mxu0 0
        %2016 = vmatprep.subr.bf16.mxu0 0
        %2017 = vmatpush1.bf16.msra.mxu0 0
        %2018 = vmatprep.subr.bf16.mxu0 0
        %2019 = vmatpush1.bf16.msra.mxu0 0
        %2020 = vmatprep.mubr.bf16.mxu0 %v1986
        %2021 = vmatmul.mubr.bf16.gmra.mrb[0].mxu0 %v1455
        %v2022 = vpop.f32.mrb[0].mxu0
        %v2023 = vadd.f32 0.0, %v2022
        %v2024 = vpop.f32.mrb[0].mxu0
        %v2025 = vadd.f32 0.0, %v2024
        %v2026 = vpop.f32.mrb[0].mxu0
        %v2027 = vpop.f32.mrb[0].mxu0
        %2028 = vdwg.mxu0
        %v2029 = vmul.f32 %v2023, %v1960
        %v2030 = vmul.f32 %v2025, %v1962
        %v2031 = vpack.c.bf16 %v290, %v290
        %v2032 = vpack.c.bf16 %v291, %v291
        %v2033 = vmul.f32 %v290, 0.35355338
        %v2034 = vmul.f32 %v291, 0.35355338
        %v2035 = vpack.c.bf16 %v2033, %v2033
        %v2036 = vpack.c.bf16 %v2034, %v2034
        %2037 = vxpose.xlu0.c.b16.start [1/8] %v2031, 128
        %2038 = vxpose.xlu0.c.b16.cont [2/8] 0, 128
        %2039 = vxpose.xlu0.c.b16.cont [3/8] 0, 128
        %2040 = vxpose.xlu0.c.b16.cont [4/8] 0, 128
        %2041 = vxpose.xlu0.c.b16.cont [5/8] 0, 128
        %2042 = vxpose.xlu0.c.b16.cont [6/8] 0, 128
        %2043 = vxpose.xlu0.c.b16.cont [7/8] 0, 128
        %2044 = vxpose.xlu0.c.b16.end [8/8] 0, 128
        %v2045 = vpop.trf.xlu0
        %v2046 = vpop.trf.xlu0
        %v2047 = vpop.trf.xlu0
        %v2048 = vpop.trf.xlu0
        %v2049 = vpop.trf.xlu0
        %v2050 = vpop.trf.xlu0
        %v2051 = vpop.trf.xlu0
        %v2052 = vpop.trf.xlu0
        %2053 = vxpose.xlu0.c.b16.start [1/8] %v2032, 128
        %2054 = vxpose.xlu0.c.b16.cont [2/8] 0, 128
        %2055 = vxpose.xlu0.c.b16.cont [3/8] 0, 128
        %2056 = vxpose.xlu0.c.b16.cont [4/8] 0, 128
        %2057 = vxpose.xlu0.c.b16.cont [5/8] 0, 128
        %2058 = vxpose.xlu0.c.b16.cont [6/8] 0, 128
        %2059 = vxpose.xlu0.c.b16.cont [7/8] 0, 128
        %2060 = vxpose.xlu0.c.b16.end [8/8] 0, 128
        %v2061 = vpop.trf.xlu0
        %v2062 = vpop.trf.xlu0
        %v2063 = vpop.trf.xlu0
        %v2064 = vpop.trf.xlu0
        %v2065 = vpop.trf.xlu0
        %v2066 = vpop.trf.xlu0
        %v2067 = vpop.trf.xlu0
        %v2068 = vpop.trf.xlu0
        %v2070 = vsel %vm338, %v2045, 0
        %v2073 = vsel %vm338, %v2046, 0
        %v2076 = vsel %vm338, %v2047, 0
        %v2079 = vsel %vm338, %v2048, 0
        %v2082 = vsel %vm338, %v2049, 0
        %v2085 = vsel %vm338, %v2050, 0
        %v2088 = vsel %vm338, %v2051, 0
        %v2091 = vsel %vm338, %v2052, 0
        %v2094 = vsel %vm338, %v2061, 0
        %v2097 = vsel %vm338, %v2062, 0
        %v2100 = vsel %vm338, %v2063, 0
        %v2103 = vsel %vm372, %v2035, 0
        %v2106 = vsel %vm372, %v2036, 0
        %2108 = vmatprep.subr.bf16.mxu0 %v2106
        %2109 = vmatpush1.bf16.msra.mxu0 %v2103
        %2110 = vmatprep.subr.bf16.mxu0 0
        %2111 = vmatpush1.bf16.msra.mxu0 0
        %2112 = vmatprep.subr.bf16.mxu0 0
        %2113 = vmatpush1.bf16.msra.mxu0 0
        %2114 = vmatprep.subr.bf16.mxu0 0
        %2115 = vmatpush1.bf16.msra.mxu0 0
        %2116 = vmatprep.subr.bf16.mxu0 0
        %2117 = vmatpush1.bf16.msra.mxu0 0
        %2118 = vmatprep.subr.bf16.mxu0 0
        %2119 = vmatpush1.bf16.msra.mxu0 0
        %2120 = vmatprep.subr.bf16.mxu0 0
        %2121 = vmatpush1.bf16.msra.mxu0 0
        %2122 = vmatprep.subr.bf16.mxu0 0
        %2123 = vmatpush1.bf16.msra.mxu0 0
        %2124 = vmatprep.subr.bf16.mxu0 0
        %2125 = vmatpush1.bf16.msra.mxu0 0
        %2126 = vmatprep.subr.bf16.mxu0 0
        %2127 = vmatpush1.bf16.msra.mxu0 0
        %2128 = vmatprep.subr.bf16.mxu0 0
        %2129 = vmatpush1.bf16.msra.mxu0 0
        %2130 = vmatprep.subr.bf16.mxu0 0
        %2131 = vmatpush1.bf16.msra.mxu0 0
        %2132 = vmatprep.subr.bf16.mxu0 0
        %2133 = vmatpush1.bf16.msra.mxu0 0
        %2134 = vmatprep.subr.bf16.mxu0 0
        %2135 = vmatpush1.bf16.msra.mxu0 0
        %2136 = vmatprep.subr.bf16.mxu0 0
        %2137 = vmatpush1.bf16.msra.mxu0 0
        %2138 = vmatprep.subr.bf16.mxu0 0
        %2139 = vmatpush1.bf16.msra.mxu0 0
        %2140 = vmatprep.mubr.bf16.mxu0 0
        %2141 = vmatmul.mubr.bf16.gmra.mrb[0].mxu0 %v2070
        %v2142 = vpop.f32.mrb[0].mxu0
        %v2143 = vadd.f32 0.0, %v2142
        %v2144 = vpop.f32.mrb[0].mxu0
        %v2145 = vadd.f32 0.0, %v2144
        %v2146 = vpop.f32.mrb[0].mxu0
        %v2147 = vadd.f32 0.0, %v2146
        %v2148 = vpop.f32.mrb[0].mxu0
        %v2149 = vadd.f32 0.0, %v2148
        %2150 = vmatprep.mubr.bf16.mxu0 0
        %2151 = vmatmul.mubr.bf16.gmra.mrb[0].mxu0 %v2073
        %v2152 = vpop.f32.mrb[0].mxu0
        %v2153 = vadd.f32 0.0, %v2152
        %v2154 = vpop.f32.mrb[0].mxu0
        %v2155 = vadd.f32 0.0, %v2154
        %v2156 = vpop.f32.mrb[0].mxu0
        %v2157 = vadd.f32 0.0, %v2156
        %v2158 = vpop.f32.mrb[0].mxu0
        %v2159 = vadd.f32 0.0, %v2158
        %2160 = vmatprep.mubr.bf16.mxu0 0
        %2161 = vmatmul.mubr.bf16.gmra.mrb[0].mxu0 %v2076
        %v2162 = vpop.f32.mrb[0].mxu0
        %v2163 = vadd.f32 0.0, %v2162
        %v2164 = vpop.f32.mrb[0].mxu0
        %v2165 = vadd.f32 0.0, %v2164
        %v2166 = vpop.f32.mrb[0].mxu0
        %v2167 = vadd.f32 0.0, %v2166
        %v2168 = vpop.f32.mrb[0].mxu0
        %v2169 = vadd.f32 0.0, %v2168
        %2170 = vmatprep.mubr.bf16.mxu0 0
        %2171 = vmatmul.mubr.bf16.gmra.mrb[0].mxu0 %v2079
        %v2172 = vpop.f32.mrb[0].mxu0
        %v2173 = vadd.f32 0.0, %v2172
        %v2174 = vpop.f32.mrb[0].mxu0
        %v2175 = vadd.f32 0.0, %v2174
        %v2176 = vpop.f32.mrb[0].mxu0
        %v2177 = vadd.f32 0.0, %v2176
        %v2178 = vpop.f32.mrb[0].mxu0
        %v2179 = vadd.f32 0.0, %v2178
        %2180 = vmatprep.mubr.bf16.mxu0 0
        %2181 = vmatmul.mubr.bf16.gmra.mrb[0].mxu0 %v2082
        %v2182 = vpop.f32.mrb[0].mxu0
        %v2183 = vadd.f32 0.0, %v2182
        %v2184 = vpop.f32.mrb[0].mxu0
        %v2185 = vadd.f32 0.0, %v2184
        %v2186 = vpop.f32.mrb[0].mxu0
        %v2187 = vadd.f32 0.0, %v2186
        %v2188 = vpop.f32.mrb[0].mxu0
        %v2189 = vadd.f32 0.0, %v2188
        %2190 = vmatprep.mubr.bf16.mxu0 0
        %2191 = vmatmul.mubr.bf16.gmra.mrb[0].mxu0 %v2085
        %v2192 = vpop.f32.mrb[0].mxu0
        %v2193 = vadd.f32 0.0, %v2192
        %v2194 = vpop.f32.mrb[0].mxu0
        %v2195 = vadd.f32 0.0, %v2194
        %v2196 = vpop.f32.mrb[0].mxu0
        %v2197 = vadd.f32 0.0, %v2196
        %v2198 = vpop.f32.mrb[0].mxu0
        %v2199 = vadd.f32 0.0, %v2198
        %2200 = vmatprep.mubr.bf16.mxu0 0
        %2201 = vmatmul.mubr.bf16.gmra.mrb[0].mxu0 %v2088
        %v2202 = vpop.f32.mrb[0].mxu0
        %v2203 = vadd.f32 0.0, %v2202
        %v2204 = vpop.f32.mrb[0].mxu0
        %v2205 = vadd.f32 0.0, %v2204
        %v2206 = vpop.f32.mrb[0].mxu0
        %v2207 = vadd.f32 0.0, %v2206
        %v2208 = vpop.f32.mrb[0].mxu0
        %v2209 = vadd.f32 0.0, %v2208
        %2210 = vmatprep.mubr.bf16.mxu0 0
        %2211 = vmatmul.mubr.bf16.gmra.mrb[0].mxu0 %v2091
        %v2212 = vpop.f32.mrb[0].mxu0
        %v2213 = vadd.f32 0.0, %v2212
        %v2214 = vpop.f32.mrb[0].mxu0
        %v2215 = vadd.f32 0.0, %v2214
        %v2216 = vpop.f32.mrb[0].mxu0
        %v2217 = vadd.f32 0.0, %v2216
        %v2218 = vpop.f32.mrb[0].mxu0
        %v2219 = vadd.f32 0.0, %v2218
        %2220 = vmatprep.mubr.bf16.mxu0 0
        %2221 = vmatmul.mubr.bf16.gmra.mrb[0].mxu0 %v2094
        %v2222 = vpop.f32.mrb[0].mxu0
        %v2223 = vadd.f32 0.0, %v2222
        %v2224 = vpop.f32.mrb[0].mxu0
        %v2225 = vadd.f32 0.0, %v2224
        %v2226 = vpop.f32.mrb[0].mxu0
        %v2227 = vadd.f32 0.0, %v2226
        %v2228 = vpop.f32.mrb[0].mxu0
        %v2229 = vadd.f32 0.0, %v2228
        %2230 = vmatprep.mubr.bf16.mxu0 0
        %2231 = vmatmul.mubr.bf16.gmra.mrb[0].mxu0 %v2097
        %v2232 = vpop.f32.mrb[0].mxu0
        %v2233 = vadd.f32 0.0, %v2232
        %v2234 = vpop.f32.mrb[0].mxu0
        %v2235 = vadd.f32 0.0, %v2234
        %v2236 = vpop.f32.mrb[0].mxu0
        %v2237 = vadd.f32 0.0, %v2236
        %v2238 = vpop.f32.mrb[0].mxu0
        %v2239 = vadd.f32 0.0, %v2238
        %2240 = vmatprep.mubr.bf16.mxu0 0
        %2241 = vmatmul.mubr.bf16.gmra.mrb[0].mxu0 %v2100
        %v2242 = vpop.f32.mrb[0].mxu0
        %v2243 = vadd.f32 0.0, %v2242
        %v2244 = vpop.f32.mrb[0].mxu0
        %v2245 = vadd.f32 0.0, %v2244
        %v2246 = vpop.f32.mrb[0].mxu0
        %v2247 = vadd.f32 0.0, %v2246
        %v2248 = vpop.f32.mrb[0].mxu0
        %v2249 = vadd.f32 0.0, %v2248
        %2250 = vdwg.mxu0
        %v2251 = vmax.f32 %v2143, %v2153
        %v2252 = vmax.f32 %v2147, %v2157
        %v2253 = vmax.f32 %v2251, %v2163
        %v2254 = vmax.f32 %v2252, %v2167
        %v2255 = vmax.f32 %v2253, %v2173
        %v2256 = vmax.f32 %v2254, %v2177
        %v2257 = vmax.f32 %v2255, %v2183
        %v2258 = vmax.f32 %v2256, %v2187
        %v2259 = vmax.f32 %v2257, %v2193
        %v2260 = vmax.f32 %v2258, %v2197
        %v2261 = vmax.f32 %v2259, %v2203
        %v2262 = vmax.f32 %v2260, %v2207
        %v2263 = vmax.f32 %v2261, %v2213
        %v2264 = vmax.f32 %v2262, %v2217
        %v2265 = vmax.f32 %v2263, %v2223
        %v2266 = vmax.f32 %v2264, %v2227
        %v2267 = vmax.f32 %v2265, %v2233
        %v2268 = vmax.f32 %v2266, %v2237
        %v2269 = vmax.f32 %v2267, %v2243
        %v2270 = vmax.f32 %v2268, %v2247
        %v2271 = vmax.f32 %v2269, %v2270
        %v2272 = vrot.slane %v2271, 4
        %v2273 = vmax.f32 %v2271, %v2272
        %v2274 = vrot.slane %v2273, 2
        %v2275 = vmax.f32 %v2273, %v2274
        %v2276 = vrot.slane %v2275, 1
        %v2277 = vmax.f32 %v2275, %v2276
        %v2278 = vsel %vm549, %v2145, -inf
        %v2279 = vsel %vm549, %v2149, -inf
        %v2280 = vsel %vm549, %v2155, -inf
        %v2281 = vmax.f32 %v2278, %v2280
        %v2282 = vsel %vm549, %v2159, -inf
        %v2283 = vmax.f32 %v2279, %v2282
        %v2284 = vsel %vm549, %v2165, -inf
        %v2285 = vmax.f32 %v2281, %v2284
        %v2286 = vsel %vm549, %v2169, -inf
        %v2287 = vmax.f32 %v2283, %v2286
        %v2288 = vsel %vm549, %v2175, -inf
        %v2289 = vmax.f32 %v2285, %v2288
        %v2290 = vsel %vm549, %v2179, -inf
        %v2291 = vmax.f32 %v2287, %v2290
        %v2292 = vsel %vm549, %v2185, -inf
        %v2293 = vmax.f32 %v2289, %v2292
        %v2294 = vsel %vm549, %v2189, -inf
        %v2295 = vmax.f32 %v2291, %v2294
        %v2296 = vsel %vm549, %v2195, -inf
        %v2297 = vmax.f32 %v2293, %v2296
        %v2298 = vsel %vm549, %v2199, -inf
        %v2299 = vmax.f32 %v2295, %v2298
        %v2300 = vsel %vm549, %v2205, -inf
        %v2301 = vmax.f32 %v2297, %v2300
        %v2302 = vsel %vm549, %v2209, -inf
        %v2303 = vmax.f32 %v2299, %v2302
        %v2304 = vsel %vm549, %v2215, -inf
        %v2305 = vmax.f32 %v2301, %v2304
        %v2306 = vsel %vm549, %v2219, -inf
        %v2307 = vmax.f32 %v2303, %v2306
        %v2308 = vsel %vm549, %v2225, -inf
        %v2309 = vmax.f32 %v2305, %v2308
        %v2310 = vsel %vm549, %v2229, -inf
        %v2311 = vmax.f32 %v2307, %v2310
        %v2312 = vsel %vm549, %v2235, -inf
        %v2313 = vmax.f32 %v2309, %v2312
        %v2314 = vsel %vm549, %v2239, -inf
        %v2315 = vmax.f32 %v2311, %v2314
        %v2316 = vsel %vm549, %v2245, -inf
        %v2317 = vmax.f32 %v2313, %v2316
        %v2318 = vsel %vm549, %v2249, -inf
        %v2319 = vmax.f32 %v2315, %v2318
        %v2320 = vmax.f32 %v2317, %v2319
        %v2321 = vrot.slane %v2320, 4
        %v2322 = vmax.f32 %v2320, %v2321
        %v2323 = vrot.slane %v2322, 2
        %v2324 = vmax.f32 %v2322, %v2323
        %v2325 = vrot.slane %v2324, 1
        %v2326 = vmax.f32 %v2324, %v2325
        %v2327 = vsub.f32 %v2143, %v2277
        %v2328 = vsub.f32 %v2145, %v2326
        %v2329 = vsub.f32 %v2147, %v2277
        %v2330 = vsub.f32 %v2149, %v2326
        %v2331 = vsub.f32 %v2153, %v2277
        %v2332 = vsub.f32 %v2155, %v2326
        %v2333 = vsub.f32 %v2157, %v2277
        %v2334 = vsub.f32 %v2159, %v2326
        %v2335 = vsub.f32 %v2163, %v2277
        %v2336 = vsub.f32 %v2165, %v2326
        %v2337 = vsub.f32 %v2167, %v2277
        %v2338 = vsub.f32 %v2169, %v2326
        %v2339 = vsub.f32 %v2173, %v2277
        %v2340 = vsub.f32 %v2175, %v2326
        %v2341 = vsub.f32 %v2177, %v2277
        %v2342 = vsub.f32 %v2179, %v2326
        %v2343 = vsub.f32 %v2183, %v2277
        %v2344 = vsub.f32 %v2185, %v2326
        %v2345 = vsub.f32 %v2187, %v2277
        %v2346 = vsub.f32 %v2189, %v2326
        %v2347 = vsub.f32 %v2193, %v2277
        %v2348 = vsub.f32 %v2195, %v2326
        %v2349 = vsub.f32 %v2197, %v2277
        %v2350 = vsub.f32 %v2199, %v2326
        %v2351 = vsub.f32 %v2203, %v2277
        %v2352 = vsub.f32 %v2205, %v2326
        %v2353 = vsub.f32 %v2207, %v2277
        %v2354 = vsub.f32 %v2209, %v2326
        %v2355 = vsub.f32 %v2213, %v2277
        %v2356 = vsub.f32 %v2215, %v2326
        %v2357 = vsub.f32 %v2217, %v2277
        %v2358 = vsub.f32 %v2219, %v2326
        %v2359 = vsub.f32 %v2223, %v2277
        %v2360 = vsub.f32 %v2225, %v2326
        %v2361 = vsub.f32 %v2227, %v2277
        %v2362 = vsub.f32 %v2229, %v2326
        %v2363 = vsub.f32 %v2233, %v2277
        %v2364 = vsub.f32 %v2235, %v2326
        %v2365 = vsub.f32 %v2237, %v2277
        %v2366 = vsub.f32 %v2239, %v2326
        %v2367 = vsub.f32 %v2243, %v2277
        %v2368 = vsub.f32 %v2245, %v2326
        %v2369 = vsub.f32 %v2247, %v2277
        %v2370 = vsub.f32 %v2249, %v2326
        %v2371 = vmul.f32 %v2327, 1.442695
        %v2372 = vpow.pop %v2371
        %v2373 = vmul.f32 %v2328, 1.442695
        %v2374 = vpow.pop %v2373
        %v2375 = vmul.f32 %v2329, 1.442695
        %v2376 = vpow.pop %v2375
        %v2377 = vmul.f32 %v2330, 1.442695
        %v2378 = vpow.pop %v2377
        %v2379 = vmul.f32 %v2331, 1.442695
        %v2380 = vpow.pop %v2379
        %v2381 = vmul.f32 %v2332, 1.442695
        %v2382 = vpow.pop %v2381
        %v2383 = vmul.f32 %v2333, 1.442695
        %v2384 = vpow.pop %v2383
        %v2385 = vmul.f32 %v2334, 1.442695
        %v2386 = vpow.pop %v2385
        %v2387 = vmul.f32 %v2335, 1.442695
        %v2388 = vpow.pop %v2387
        %v2389 = vmul.f32 %v2336, 1.442695
        %v2390 = vpow.pop %v2389
        %v2391 = vmul.f32 %v2337, 1.442695
        %v2392 = vpow.pop %v2391
        %v2393 = vmul.f32 %v2338, 1.442695
        %v2394 = vpow.pop %v2393
        %v2395 = vmul.f32 %v2339, 1.442695
        %v2396 = vpow.pop %v2395
        %v2397 = vmul.f32 %v2340, 1.442695
        %v2398 = vpow.pop %v2397
        %v2399 = vmul.f32 %v2341, 1.442695
        %v2400 = vpow.pop %v2399
        %v2401 = vmul.f32 %v2342, 1.442695
        %v2402 = vpow.pop %v2401
        %v2403 = vmul.f32 %v2343, 1.442695
        %v2404 = vpow.pop %v2403
        %v2405 = vmul.f32 %v2344, 1.442695
        %v2406 = vpow.pop %v2405
        %v2407 = vmul.f32 %v2345, 1.442695
        %v2408 = vpow.pop %v2407
        %v2409 = vmul.f32 %v2346, 1.442695
        %v2410 = vpow.pop %v2409
        %v2411 = vmul.f32 %v2347, 1.442695
        %v2412 = vpow.pop %v2411
        %v2413 = vmul.f32 %v2348, 1.442695
        %v2414 = vpow.pop %v2413
        %v2415 = vmul.f32 %v2349, 1.442695
        %v2416 = vpow.pop %v2415
        %v2417 = vmul.f32 %v2350, 1.442695
        %v2418 = vpow.pop %v2417
        %v2419 = vmul.f32 %v2351, 1.442695
        %v2420 = vpow.pop %v2419
        %v2421 = vmul.f32 %v2352, 1.442695
        %v2422 = vpow.pop %v2421
        %v2423 = vmul.f32 %v2353, 1.442695
        %v2424 = vpow.pop %v2423
        %v2425 = vmul.f32 %v2354, 1.442695
        %v2426 = vpow.pop %v2425
        %v2427 = vmul.f32 %v2355, 1.442695
        %v2428 = vpow.pop %v2427
        %v2429 = vmul.f32 %v2356, 1.442695
        %v2430 = vpow.pop %v2429
        %v2431 = vmul.f32 %v2357, 1.442695
        %v2432 = vpow.pop %v2431
        %v2433 = vmul.f32 %v2358, 1.442695
        %v2434 = vpow.pop %v2433
        %v2435 = vmul.f32 %v2359, 1.442695
        %v2436 = vpow.pop %v2435
        %v2437 = vmul.f32 %v2360, 1.442695
        %v2438 = vpow.pop %v2437
        %v2439 = vmul.f32 %v2361, 1.442695
        %v2440 = vpow.pop %v2439
        %v2441 = vmul.f32 %v2362, 1.442695
        %v2442 = vpow.pop %v2441
        %v2443 = vmul.f32 %v2363, 1.442695
        %v2444 = vpow.pop %v2443
        %v2445 = vmul.f32 %v2364, 1.442695
        %v2446 = vpow.pop %v2445
        %v2447 = vmul.f32 %v2365, 1.442695
        %v2448 = vpow.pop %v2447
        %v2449 = vmul.f32 %v2366, 1.442695
        %v2450 = vpow.pop %v2449
        %v2451 = vmul.f32 %v2367, 1.442695
        %v2452 = vpow.pop %v2451
        %v2453 = vmul.f32 %v2368, 1.442695
        %v2454 = vpow.pop %v2453
        %v2455 = vmul.f32 %v2369, 1.442695
        %v2456 = vpow.pop %v2455
        %v2457 = vmul.f32 %v2370, 1.442695
        %v2458 = vpow.pop %v2457
        %v2459 = vadd.f32 %v2372, %v2376
        %v2460 = vadd.f32 %v2459, %v2380
        %v2461 = vadd.f32 %v2460, %v2384
        %v2462 = vadd.f32 %v2461, %v2388
        %v2463 = vadd.f32 %v2462, %v2392
        %v2464 = vadd.f32 %v2463, %v2396
        %v2465 = vadd.f32 %v2464, %v2400
        %v2466 = vadd.f32 %v2465, %v2404
        %v2467 = vadd.f32 %v2466, %v2408
        %v2468 = vadd.f32 %v2467, %v2412
        %v2469 = vadd.f32 %v2468, %v2416
        %v2470 = vadd.f32 %v2469, %v2420
        %v2471 = vadd.f32 %v2470, %v2424
        %v2472 = vadd.f32 %v2471, %v2428
        %v2473 = vadd.f32 %v2472, %v2432
        %v2474 = vadd.f32 %v2473, %v2436
        %v2475 = vadd.f32 %v2474, %v2440
        %v2476 = vadd.f32 %v2475, %v2444
        %v2477 = vadd.f32 %v2476, %v2448
        %v2478 = vadd.f32 %v2477, %v2452
        %v2479 = vadd.f32 %v2478, %v2456
        %v2480 = vrot.slane %v2479, 4
        %v2481 = vadd.f32 %v2479, %v2480
        %v2482 = vrot.slane %v2481, 2
        %v2483 = vadd.f32 %v2481, %v2482
        %v2484 = vrot.slane %v2483, 1
        %v2485 = vadd.f32 %v2483, %v2484
        %v2486 = vsel %vm549, %v2374, 0.0
        %v2487 = vsel %vm549, %v2378, 0.0
        %v2488 = vadd.f32 %v2486, %v2487
        %v2489 = vsel %vm549, %v2382, 0.0
        %v2490 = vadd.f32 %v2488, %v2489
        %v2491 = vsel %vm549, %v2386, 0.0
        %v2492 = vadd.f32 %v2490, %v2491
        %v2493 = vsel %vm549, %v2390, 0.0
        %v2494 = vadd.f32 %v2492, %v2493
        %v2495 = vsel %vm549, %v2394, 0.0
        %v2496 = vadd.f32 %v2494, %v2495
        %v2497 = vsel %vm549, %v2398, 0.0
        %v2498 = vadd.f32 %v2496, %v2497
        %v2499 = vsel %vm549, %v2402, 0.0
        %v2500 = vadd.f32 %v2498, %v2499
        %v2501 = vsel %vm549, %v2406, 0.0
        %v2502 = vadd.f32 %v2500, %v2501
        %v2503 = vsel %vm549, %v2410, 0.0
        %v2504 = vadd.f32 %v2502, %v2503
        %v2505 = vsel %vm549, %v2414, 0.0
        %v2506 = vadd.f32 %v2504, %v2505
        %v2507 = vsel %vm549, %v2418, 0.0
        %v2508 = vadd.f32 %v2506, %v2507
        %v2509 = vsel %vm549, %v2422, 0.0
        %v2510 = vadd.f32 %v2508, %v2509
        %v2511 = vsel %vm549, %v2426, 0.0
        %v2512 = vadd.f32 %v2510, %v2511
        %v2513 = vsel %vm549, %v2430, 0.0
        %v2514 = vadd.f32 %v2512, %v2513
        %v2515 = vsel %vm549, %v2434, 0.0
        %v2516 = vadd.f32 %v2514, %v2515
        %v2517 = vsel %vm549, %v2438, 0.0
        %v2518 = vadd.f32 %v2516, %v2517
        %v2519 = vsel %vm549, %v2442, 0.0
        %v2520 = vadd.f32 %v2518, %v2519
        %v2521 = vsel %vm549, %v2446, 0.0
        %v2522 = vadd.f32 %v2520, %v2521
        %v2523 = vsel %vm549, %v2450, 0.0
        %v2524 = vadd.f32 %v2522, %v2523
        %v2525 = vsel %vm549, %v2454, 0.0
        %v2526 = vadd.f32 %v2524, %v2525
        %v2527 = vsel %vm549, %v2458, 0.0
        %v2528 = vadd.f32 %v2526, %v2527
        %v2529 = vrot.slane %v2528, 4
        %v2530 = vadd.f32 %v2528, %v2529
        %v2531 = vrot.slane %v2530, 2
        %v2532 = vadd.f32 %v2530, %v2531
        %v2533 = vrot.slane %v2532, 1
        %v2534 = vadd.f32 %v2532, %v2533
        %v2535 = vrcp.pop %v2485
        %v2536 = vmul.f32 1.0, %v2535
        %v2537 = vrcp.pop %v2534
        %v2538 = vmul.f32 1.0, %v2537
        %v2539 = vpack.c.bf16 %v2376, %v2372
        %v2540 = vpack.c.bf16 %v2378, %v2374
        %v2541 = vpack.c.bf16 %v2384, %v2380
        %v2542 = vpack.c.bf16 %v2386, %v2382
        %v2543 = vpack.c.bf16 %v2392, %v2388
        %v2544 = vpack.c.bf16 %v2394, %v2390
        %v2545 = vpack.c.bf16 %v2400, %v2396
        %v2546 = vpack.c.bf16 %v2402, %v2398
        %v2547 = vpack.c.bf16 %v2408, %v2404
        %v2548 = vpack.c.bf16 %v2410, %v2406
        %v2549 = vpack.c.bf16 %v2416, %v2412
        %v2550 = vpack.c.bf16 %v2418, %v2414
        %v2551 = vpack.c.bf16 %v2424, %v2420
        %v2552 = vpack.c.bf16 %v2426, %v2422
        %v2553 = vpack.c.bf16 %v2432, %v2428
        %v2554 = vpack.c.bf16 %v2434, %v2430
        %v2555 = vpack.c.bf16 %v2440, %v2436
        %v2556 = vpack.c.bf16 %v2442, %v2438
        %v2557 = vpack.c.bf16 %v2448, %v2444
        %v2558 = vpack.c.bf16 %v2450, %v2446
        %v2559 = vpack.c.bf16 %v2456, %v2452
        %v2560 = vpack.c.bf16 %v2458, %v2454
        %v2562 = vsel %vm549, %v2032, 0
        %2564 = vmatprep.subr.bf16.mxu0 %v2540
        %2565 = vmatpush1.bf16.msra.mxu0 %v2539
        %2566 = vmatprep.subr.bf16.mxu0 %v2542
        %2567 = vmatpush1.bf16.msra.mxu0 %v2541
        %2568 = vmatprep.subr.bf16.mxu0 %v2544
        %2569 = vmatpush1.bf16.msra.mxu0 %v2543
        %2570 = vmatprep.subr.bf16.mxu0 %v2546
        %2571 = vmatpush1.bf16.msra.mxu0 %v2545
        %2572 = vmatprep.subr.bf16.mxu0 %v2548
        %2573 = vmatpush1.bf16.msra.mxu0 %v2547
        %2574 = vmatprep.subr.bf16.mxu0 %v2550
        %2575 = vmatpush1.bf16.msra.mxu0 %v2549
        %2576 = vmatprep.subr.bf16.mxu0 %v2552
        %2577 = vmatpush1.bf16.msra.mxu0 %v2551
        %2578 = vmatprep.subr.bf16.mxu0 %v2554
        %2579 = vmatpush1.bf16.msra.mxu0 %v2553
        %2580 = vmatprep.subr.bf16.mxu0 %v2556
        %2581 = vmatpush1.bf16.msra.mxu0 %v2555
        %2582 = vmatprep.subr.bf16.mxu0 %v2558
        %2583 = vmatpush1.bf16.msra.mxu0 %v2557
        %2584 = vmatprep.subr.bf16.mxu0 %v2560
        %2585 = vmatpush1.bf16.msra.mxu0 %v2559
        %2586 = vmatprep.subr.bf16.mxu0 0
        %2587 = vmatpush1.bf16.msra.mxu0 0
        %2588 = vmatprep.subr.bf16.mxu0 0
        %2589 = vmatpush1.bf16.msra.mxu0 0
        %2590 = vmatprep.subr.bf16.mxu0 0
        %2591 = vmatpush1.bf16.msra.mxu0 0
        %2592 = vmatprep.subr.bf16.mxu0 0
        %2593 = vmatpush1.bf16.msra.mxu0 0
        %2594 = vmatprep.subr.bf16.mxu0 0
        %2595 = vmatpush1.bf16.msra.mxu0 0
        %2596 = vmatprep.mubr.bf16.mxu0 %v2562
        %2597 = vmatmul.mubr.bf16.gmra.mrb[0].mxu0 %v2031
        %v2598 = vpop.f32.mrb[0].mxu0
        %v2599 = vadd.f32 0.0, %v2598
        %v2600 = vpop.f32.mrb[0].mxu0
        %v2601 = vadd.f32 0.0, %v2600
        %v2602 = vpop.f32.mrb[0].mxu0
        %v2603 = vpop.f32.mrb[0].mxu0
        %2604 = vdwg.mxu0
        %v2605 = vmul.f32 %v2599, %v2536
        %v2606 = vmul.f32 %v2601, %v2538
        %v2607 = vpack.c.bf16 %v1453, %v877
        %v2608 = vpack.c.bf16 %v1454, %v878
        %v2609 = vpack.c.bf16 %v2605, %v2029
        %v2610 = vpack.c.bf16 %v2606, %v2030
        %2612 = vset.pattern.permute.xlu0 0
        %2613 = vperm.xlu0 %2612, %v292
        %v2614 = vpop.permute.xlu0 %2613
        %2617 = vset.pattern.permute.xlu0 0
        %2618 = vperm.xlu0 %2617, %v293
        %v2619 = vpop.permute.xlu0 %2618
        %2622 = vset.pattern.permute.xlu0 0
        %2623 = vperm.xlu0 %2622, %v294
        %v2624 = vpop.permute.xlu0 %2623
        %2627 = vset.pattern.permute.xlu0 0
        %2628 = vperm.xlu0 %2627, %v295
        %v2629 = vpop.permute.xlu0 %2628
        %v2635 = vunpack.c.l.b16 %v296
        %v2636 = vunpack.c.l.b16 %v297
        %v2637 = vunpack.c.l.b16 %v298
        %v2638 = vunpack.c.l.b16 %v299
        %v2639 = vpack.c.b16 %v2636, %v2635
        %v2640 = vpack.c.b16 %v2638, %v2637
        %vm2641 = vcmask 261120
        %v2643 = vsel %vm2641, %v2639, 0
        %v2646 = vsel %vm2641, %v2640, 0
        %2648 = vmatprep.subr.bf16.mxu0 %v2608
        %2649 = vmatpush1.bf16.msra.mxu0 %v2607
        %2650 = vmatprep.subr.bf16.mxu0 %v2610
        %2651 = vmatpush1.bf16.msra.mxu0 %v2609
        %2652 = vmatprep.subr.bf16.mxu0 0
        %2653 = vmatpush1.bf16.msra.mxu0 0
        %2654 = vmatprep.subr.bf16.mxu0 0
        %2655 = vmatpush1.bf16.msra.mxu0 0
        %2656 = vmatprep.subr.bf16.mxu0 0
        %2657 = vmatpush1.bf16.msra.mxu0 0
        %2658 = vmatprep.subr.bf16.mxu0 0
        %2659 = vmatpush1.bf16.msra.mxu0 0
        %2660 = vmatprep.subr.bf16.mxu0 0
        %2661 = vmatpush1.bf16.msra.mxu0 0
        %2662 = vmatprep.subr.bf16.mxu0 0
        %2663 = vmatpush1.bf16.msra.mxu0 0
        %2664 = vmatprep.subr.bf16.mxu0 0
        %2665 = vmatpush1.bf16.msra.mxu0 0
        %2666 = vmatprep.subr.bf16.mxu0 0
        %2667 = vmatpush1.bf16.msra.mxu0 0
        %2668 = vmatprep.subr.bf16.mxu0 0
        %2669 = vmatpush1.bf16.msra.mxu0 0
        %2670 = vmatprep.subr.bf16.mxu0 0
        %2671 = vmatpush1.bf16.msra.mxu0 0
        %2672 = vmatprep.subr.bf16.mxu0 0
        %2673 = vmatpush1.bf16.msra.mxu0 0
        %2674 = vmatprep.subr.bf16.mxu0 0
        %2675 = vmatpush1.bf16.msra.mxu0 0
        %2676 = vmatprep.subr.bf16.mxu0 0
        %2677 = vmatpush1.bf16.msra.mxu0 0
        %2678 = vmatprep.subr.bf16.mxu0 0
        %2679 = vmatpush1.bf16.msra.mxu0 0
        %2680 = vmatprep.mubr.bf16.mxu0 0
        %2681 = vmatmul.mubr.bf16.gmra.mrb[0].mxu0 %v2643
        %v2682 = vpop.f32.mrb[0].mxu0
        %v2683 = vadd.f32 %v2614, %v2682
        %v2684 = vpop.f32.mrb[0].mxu0
        %v2685 = vadd.f32 %v2614, %v2684
        %v2686 = vpop.f32.mrb[0].mxu0
        %v2687 = vadd.f32 %v2619, %v2686
        %v2688 = vpop.f32.mrb[0].mxu0
        %v2689 = vadd.f32 %v2619, %v2688
        %2690 = vmatprep.mubr.bf16.mxu0 0
        %2691 = vmatmul.mubr.bf16.gmra.mrb[0].mxu0 %v2646
        %v2692 = vpop.f32.mrb[0].mxu0
        %v2693 = vadd.f32 %v2624, %v2692
        %v2694 = vpop.f32.mrb[0].mxu0
        %v2695 = vadd.f32 %v2624, %v2694
        %v2696 = vpop.f32.mrb[0].mxu0
        %v2697 = vadd.f32 %v2629, %v2696
        %v2698 = vpop.f32.mrb[0].mxu0
        %v2699 = vadd.f32 %v2629, %v2698
        %2700 = vdwg.mxu0
        %v2701 = vadd.f32 %v2683, %v284
        %v2702 = vadd.f32 %v2685, %v285
        %v2703 = vadd.f32 %v2687, %v286
        %v2704 = vadd.f32 %v2689, %v287
        %v2705 = vadd.f32 %v2693, %v288
        %v2706 = vadd.f32 %v2695, %v289
        %v2707 = vadd.f32 %v2697, %v290
        %v2708 = vadd.f32 %v2699, %v291
        %2709 = vst [vmem:[%s275] sm:$0xff] %v2701
        %2710 = vst.msk [vmem:[%s275 + $0x8] sm:$0xff] %vm549, %v2702
        %2711 = vst [vmem:[%s275 + $0x10] sm:$0xff] %v2703
        %2712 = vst.msk [vmem:[%s275 + $0x18] sm:$0xff] %vm549, %v2704
        %2713 = vst [vmem:[%s275 + $0x20] sm:$0xff] %v2705
        %2714 = vst.msk [vmem:[%s275 + $0x28] sm:$0xff] %vm549, %v2706
        %2715 = vst [vmem:[%s275 + $0x30] sm:$0xff] %v2707
        %2716 = vst.msk [vmem:[%s275 + $0x38] sm:$0xff] %vm549, %v2708
        %v2717 = vld [vmem:[%s275] sm:$0xff]
        %v2718 = vld [vmem:[%s275 + $0x8] sm:$0xff]
        %v2719 = vld [vmem:[%s275 + $0x10] sm:$0xff]
        %v2720 = vld [vmem:[%s275 + $0x18] sm:$0xff]
        %v2721 = vld [vmem:[%s275 + $0x20] sm:$0xff]
        %v2722 = vld [vmem:[%s275 + $0x28] sm:$0xff]
        %v2723 = vld [vmem:[%s275 + $0x30] sm:$0xff]
        %v2724 = vld [vmem:[%s275 + $0x38] sm:$0xff]
        %v2725 = vld [vmem:[%s3] sm:$0x1]
        %v2726 = vld [vmem:[#allocation2] sm:$0x1]
        %s2727 = vtos %v2726
        %v2728 = vstv %s2727
        %v2730 = vsel %vm2641, %v2725, 0
        %2732 = vmatprep.subr.mxu0 %v2718
        %2733 = vmatpush1.msra.mxu0 %v2717
        %2734 = vmatprep.subr.mxu0 %v2720
        %2735 = vmatpush1.msra.mxu0 %v2719
        %2736 = vmatprep.subr.mxu0 %v2722
        %2737 = vmatpush1.msra.mxu0 %v2721
        %2738 = vmatprep.subr.mxu0 %v2724
        %2739 = vmatpush1.msra.mxu0 %v2723
        %2740 = vmatprep.subr.mxu0 0.0
        %2741 = vmatpush1.msra.mxu0 0.0
        %2742 = vmatprep.subr.mxu0 0.0
        %2743 = vmatpush1.msra.mxu0 0.0
        %2744 = vmatprep.subr.mxu0 0.0
        %2745 = vmatpush1.msra.mxu0 0.0
        %2746 = vmatprep.subr.mxu0 0.0
        %2747 = vmatpush1.msra.mxu0 0.0
        %2748 = vmatprep.subr.mxu0 0.0
        %2749 = vmatpush1.msra.mxu0 0.0
        %2750 = vmatprep.subr.mxu0 0.0
        %2751 = vmatpush1.msra.mxu0 0.0
        %2752 = vmatprep.subr.mxu0 0.0
        %2753 = vmatpush1.msra.mxu0 0.0
        %2754 = vmatprep.subr.mxu0 0.0
        %2755 = vmatpush1.msra.mxu0 0.0
        %2756 = vmatprep.subr.mxu0 0.0
        %2757 = vmatpush1.msra.mxu0 0.0
        %2758 = vmatprep.subr.mxu0 0.0
        %2759 = vmatpush1.msra.mxu0 0.0
        %2760 = vmatprep.subr.mxu0 0.0
        %2761 = vmatpush1.msra.mxu0 0.0
        %2762 = vmatprep.subr.mxu0 0.0
        %2763 = vmatpush1.msra.mxu0 0.0
        %2764 = vmatprep.subr.mxu0 0.0
        %2765 = vmatpush1.msra.mxu0 0.0
        %2766 = vmatprep.subr.mxu0 0.0
        %2767 = vmatpush1.msra.mxu0 0.0
        %2768 = vmatprep.subr.mxu0 0.0
        %2769 = vmatpush1.msra.mxu0 0.0
        %2770 = vmatprep.subr.mxu0 0.0
        %2771 = vmatpush1.msra.mxu0 0.0
        %2772 = vmatprep.subr.mxu0 0.0
        %2773 = vmatpush1.msra.mxu0 0.0
        %2774 = vmatprep.subr.mxu0 0.0
        %2775 = vmatpush1.msra.mxu0 0.0
        %2776 = vmatprep.subr.mxu0 0.0
        %2777 = vmatpush1.msra.mxu0 0.0
        %2778 = vmatprep.subr.mxu0 0.0
        %2779 = vmatpush1.msra.mxu0 0.0
        %2780 = vmatprep.subr.mxu0 0.0
        %2781 = vmatpush1.msra.mxu0 0.0
        %2782 = vmatprep.subr.mxu0 0.0
        %2783 = vmatpush1.msra.mxu0 0.0
        %2784 = vmatprep.subr.mxu0 0.0
        %2785 = vmatpush1.msra.mxu0 0.0
        %2786 = vmatprep.subr.mxu0 0.0
        %2787 = vmatpush1.msra.mxu0 0.0
        %2788 = vmatprep.subr.mxu0 0.0
        %2789 = vmatpush1.msra.mxu0 0.0
        %2790 = vmatprep.subr.mxu0 0.0
        %2791 = vmatpush1.msra.mxu0 0.0
        %2792 = vmatprep.subr.mxu0 0.0
        %2793 = vmatpush1.msra.mxu0 0.0
        %2794 = vmatprep.subr.mxu0 0.0
        %2795 = vmatpush1.msra.mxu0 0.0
        %2796 = vmatprep.mubr.f32.mxu0 0.0
        %2797 = vmatmul.mubr.f32.gmra.mrb[0].mxu0 %v2730
        %v2798 = vpop.f32.mrb[0].mxu0
        %v2799 = vadd.f32 %v2728, %v2798
        %v2800 = vpop.f32.mrb[0].mxu0
        %v2801 = vadd.f32 %v2728, %v2800
        %2802 = vdwg.mxu0
        %v2803 = vxor.u32 %v2799, 2147483648
        %v2804 = vxor.u32 %v2801, 2147483648
        %v2805 = vmul.f32 %v2803, 1.442695
        %v2806 = vpow.pop %v2805
        %v2807 = vmul.f32 %v2804, 1.442695
        %v2808 = vpow.pop %v2807
        %v2809 = vadd.f32 %v2806, 1.0
        %v2810 = vadd.f32 %v2808, 1.0
        %v2811 = vrcp.pop %v2809
        %v2812 = vmul.f32 1.0, %v2811
        %v2813 = vrcp.pop %v2810
        %v2814 = vmul.f32 1.0, %v2813
        %v2817 = vcombine.low %v2812, %v2814
        %v2819 = vunpack.c.l.s4 1966171168
        %v2820 = vunpack.c.0.s8 %v2819
        %v2821 = vlaneseq
        %v2822 = vshrl.u32 %v2821, 7
        %v2823 = vsub.s32 %v2820, %v2822
        %v2824 = vrot.slane %v2817, %v2823
        %v2826 = vunpack.c.l.s4 1966171168
        %v2827 = vunpack.c.0.s8 %v2826
        %v2828 = vlaneseq
        %v2829 = vshrl.u32 %v2828, 7
        %v2830 = vsub.s32 %v2827, %v2829
        %v2831 = vrot.slane %v2824, %v2830
        %v2833 = vlaneseq
        %vm2834 = vcmp.ge.s32.totalorder %v2833, 0
        %vm2835 = vcmp.lt.s32.totalorder %v2833, 176
        %vm2836 = vmand %vm2834, %vm2835
        %2837 = vst.msk [vmem:[%s282] sm:$0x3] %vm2836, %v2831
        %s2838 = sand.u32 %s147, 1
        %s2839 = scalar_lea.sflag [#allocation5], %s2838
        %s2840 = sand.u32 %s147, 1
        %s2841 = smul.addr %s2840, 64
        %s2842 = scalar_lea.vmem [#allocation6], %s2841
        %s2843 = sand.u32 %s173, 1
        %s2844 = scalar_lea.sflag [#allocation8], %s2843
        %s2845 = sand.u32 %s173, 1
        %s2846 = smul.addr %s2845, 2
        %s2847 = scalar_lea.vmem [#allocation7], %s2846
        // Predicated region
        $region45: #{tpu_custom_call.1} parent=39 // pred_check
          %p2848 = pneg %p157
        $region46: #{tpu_custom_call.1} parent=39 // pred_check_branch
          %2850 = sbr.rel (%p2848) target = $region48
        $region47: #{tpu_custom_call.1} parent=39 // pred_region
          %s2852 = ssub.s32 1024, 1024
          %2853 = vsyncadd %s2839, %s2852
          %s2854 = smul.addr %s29, 8
          %s2855 = smul.addr %s2854, 128
          %s2856 = scalar_lea.hbm %s5, %s2855
          %s2857 = sshll.u32 %s2842, 4
          %s2858 = int_to_ptr.vmem [resolvable:$true] %s2857
          %2863 = dma.vmem_to_hbm [thread:$0]  %s2858, 1024, %s2856, %s2839, 256, 256, 16
        $region48: #{tpu_custom_call.1} parent=39 // pred_fallthru
          _
        // Predicated region
        $region49: #{tpu_custom_call.1} parent=39 // pred_check
          %p2864 = pneg %p183
        $region50: #{tpu_custom_call.1} parent=39 // pred_check_branch
          %2866 = sbr.rel (%p2864) target = $region52
        $region51: #{tpu_custom_call.1} parent=39 // pred_region
          %s2868 = ssub.s32 32, 32
          %2869 = vsyncadd %s2844, %s2868
          %s2870 = smul.addr %s29, 2
          %s2871 = smul.addr %s2870, 16
          %s2872 = scalar_lea.hbm %s6, %s2871
          %s2874 = sshll.u32 %s2847, 4
          %s2875 = int_to_ptr.vmem [resolvable:$true] %s2874
          %2877 = dma.vmem_to_hbm [thread:$0]  %s2875, 32, %s2872, %s2844
        $region52: #{tpu_custom_call.1} parent=39 // pred_fallthru
          _
      $region40: #{tpu_custom_call.1} parent=5 // pred_fallthru
        _
      %p2878 = scmp.le.s32.totalorder 2, %s24
      // Predicated region
      $region53: #{tpu_custom_call.1} parent=5 // pred_check
        %p2879 = pneg %p2878
      $region54: #{tpu_custom_call.1} parent=5 // pred_check_branch
        %2881 = sbr.rel (%p2879) target = $region56
      $region55: #{tpu_custom_call.1} parent=5 // pred_region
        %s2882 = ssub.s32 %s24, 2
        // Predicated region
        $region57: #{tpu_custom_call.1} parent=55 // pred_check
          %p2883 = pneg %p163
        $region58: #{tpu_custom_call.1} parent=55 // pred_check_branch
          %2885 = sbr.rel (%p2883) target = $region60
        $region59: #{tpu_custom_call.1} parent=55 // pred_region
          %s2886 = sand.u32 %s148, 1
          %s2887 = scalar_lea.sflag [#allocation5], %s2886
          %s2888 = sand.u32 %s148, 1
          %s2889 = smul.addr %s2888, 64
          %s2890 = scalar_lea.vmem [#allocation6], %s2889
          %2891 = dma.done %s2887, 1024
        $region60: #{tpu_custom_call.1} parent=55 // pred_fallthru
          _
        // Predicated region
        $region61: #{tpu_custom_call.1} parent=55 // pred_check
          %p2892 = pneg %p189
        $region62: #{tpu_custom_call.1} parent=55 // pred_check_branch
          %2894 = sbr.rel (%p2892) target = $region64
        $region63: #{tpu_custom_call.1} parent=55 // pred_region
          %s2895 = sand.u32 %s174, 1
          %s2896 = scalar_lea.sflag [#allocation8], %s2895
          %s2897 = sand.u32 %s174, 1
          %s2898 = smul.addr %s2897, 2
          %s2899 = scalar_lea.vmem [#allocation7], %s2898
          %2900 = dma.done %s2896, 32
        $region64: #{tpu_custom_call.1} parent=55 // pred_fallthru
          _
      $region56: #{tpu_custom_call.1} parent=5 // pred_fallthru
        _
    $region6: #{tpu_custom_call.1} parent=1 // loop_footer
      %s28 = sadd.s32 1, %s24
    $region7: #{tpu_custom_call.1} parent=1 // loop_footer_branch
      %23 = sbr.rel target = $region3
    $region8: #{tpu_custom_call.1} parent=1 // loop_exit
      _
    %2901 = vsyncpa [#allocation4], 1
    %s2902 = scalar_lea.sflag [#allocation4], 1
    %2903 = vsyncpa %s2902, 1
    %2904 = vsyncpa [#allocation5], 1
    %s2905 = scalar_lea.sflag [#allocation5], 1
    %2906 = vsyncpa %s2905, 1
    %2907 = vsyncpa [#allocation8], 1
    %s2908 = scalar_lea.sflag [#allocation8], 1
    %2909 = vsyncpa %s2908, 1

</llo_original>
